<compile_context>
chip_gen: v5e
topology: v5e:2x2
jax: 0.10.0
libtpu: 0.0.40
codegen_flags: <defaults>
</compile_context>

<pallas_src>
import functools

import jax
import jax.numpy as jnp
from jax import lax
from jax.experimental import pallas as pl
from jax.experimental.pallas import tpu as pltpu

BN_EPS = 1e-5

# Row index of each packed (1, d) parameter vector in the lane-aligned table.
_ROW = {"bb": 0,
        "b1": 1, "g1": 2, "t1": 3,
        "b2": 4, "g2": 5, "t2": 6,
        "b3": 7, "g3": 8, "t3": 9}
_NROWS = len(_ROW)


def _round_up(x, m):
    return ((x + m - 1) // m) * m


# ----------------------------- Pallas kernel -------------------------------
def _predict_aug_kernel(dims,
                        x_ref, wb_ref, vec_ref, w1_ref, w2_ref, w3_ref,
                        w4t_ref, b4_ref, yt_ref,
                        logits_ref, loss_ref,
                        feats_acc):
    D0, D1, D2, D3 = dims
    k = pl.program_id(0)

    @pl.when(k == 0)
    def _():
        feats_acc[...] = jnp.zeros_like(feats_acc)

    # --- backbone Linear(F -> D0), K-tiled: accumulate partial products ---
    feats_acc[...] += jnp.dot(x_ref[...], wb_ref[...],
                              preferred_element_type=jnp.float32)

    # --- projector + loss epilogue: only on the last K tile ---
    @pl.when(k == pl.num_programs(0) - 1)
    def _():
        def row(name, d):
            r = _ROW[name]
            return vec_ref[r:r + 1, :d]           # lane-aligned static slice

        feats = feats_acc[...] + row("bb", D0)     # [B, D0] f32

        def lin_bn_relu(h, w_ref, d, bn, gn, tn):
            hh = jnp.dot(h.astype(jnp.bfloat16), w_ref[...],
                         preferred_element_type=jnp.float32) + row(bn, d)
            # Two-pass train-mode BatchNorm1d statistics (biased variance).
            mu = jnp.mean(hh, axis=0, keepdims=True)
            c = hh - mu
            var = jnp.mean(c * c, axis=0, keepdims=True)
            hh = c * lax.rsqrt(var + BN_EPS) * row(gn, d) + row(tn, d)
            return jnp.maximum(hh, 0.0)

        h = lin_bn_relu(feats, w1_ref, D1, "b1", "g1", "t1")   # [B, 256]
        h = lin_bn_relu(h, w2_ref, D2, "b2", "g2", "t2")       # [B, 64]
        h = lin_bn_relu(h, w3_ref, D3, "b3", "g3", "t3")       # [B, 16]

        # --- final Linear(D3 -> out_dim), emitted lane-dense as (out_dim, B)
        z_t = jnp.einsum("ok,bk->ob", w4t_ref[...], h.astype(jnp.bfloat16),
                         preferred_element_type=jnp.float32) + b4_ref[...]
        logits_ref[...] = z_t

        # --- binary_cross_entropy_with_logits, mean reduction (f32) ---
        yt = yt_ref[...]
        per = (jnp.maximum(z_t, 0.0) - z_t * yt
               + jnp.log1p(jnp.exp(-jnp.abs(z_t))))
        loss_ref[0, 0] = jnp.mean(per)            # scalar out via SMEM


# --------------------------- one-time packing --------------------------------
def prepare_params(params):
    """Pack / cast PredictAug parameters for the kernel.

    Call this once at parameter-creation / update time, NOT per step, so the
    per-step hot path contains only the fused kernel (no per-call astype /
    concat XLA kernels re-reading every weight from HBM).
    """
    D0 = params["wb"].shape[1]
    D1 = params["w1"].shape[1]
    D2 = params["w2"].shape[1]
    D3 = params["w3"].shape[1]
    F = params["wb"].shape[0]

    # Lane-aligned parameter table: one row per bias/gamma/beta vector.
    width = _round_up(max(D0, D1, D2, D3), 128)
    rows = [None] * _NROWS
    for name, r in _ROW.items():
        v = jnp.reshape(params[name].astype(jnp.float32), (-1,))
        rows[r] = jnp.pad(v, (0, width - v.shape[0]))
    vec = jnp.stack(rows, axis=0)                        # (10, width) f32

    # Backbone weight in bf16, K padded (with zeros) to a multiple of the
    # K tile so the grid divides evenly; zero rows contribute nothing.
    TK = F if F <= 512 else 512
    F_pad = _round_up(F, TK)
    wb = params["wb"].astype(jnp.bfloat16)
    if F_pad != F:
        wb = jnp.pad(wb, ((0, F_pad - F), (0, 0)))

    return {
        "wb": wb,                                        # (F_pad, D0) bf16
        "w1": params["w1"].astype(jnp.bfloat16),
        "w2": params["w2"].astype(jnp.bfloat16),
        "w3": params["w3"].astype(jnp.bfloat16),
        "w4t": jnp.transpose(params["w4"].astype(jnp.bfloat16)),  # (out, D3)
        "b4": jnp.transpose(params["b4"].astype(jnp.float32)),    # (out, 1)
        "vec": vec,
    }


# ------------------------------ forward --------------------------------------
@jax.jit
def predict_aug_forward(x_nchw, y, prep):
    B = x_nchw.shape[0]
    wb, vec = prep["wb"], prep["vec"]
    w1, w2, w3 = prep["w1"], prep["w2"], prep["w3"]
    w4t, b4 = prep["w4t"], prep["b4"]
    F_pad, D0 = wb.shape
    D1, D2, D3 = w1.shape[1], w2.shape[1], w3.shape[1]
    out_dim = w4t.shape[0]
    assert y.shape == (B, out_dim), (
        f"y must have shape {(B, out_dim)}, got {y.shape}")

    TK = F_pad if F_pad <= 512 else 512
    n_k = F_pad // TK

    # Per-call activation prep only (weights are pre-packed in `prep`).
    x_flat = jnp.reshape(x_nchw, (B, -1)).astype(jnp.bfloat16)
    F = x_flat.shape[1]
    if F != F_pad:
        x_flat = jnp.pad(x_flat, ((0, 0), (0, F_pad - F)))
    y_t = jnp.transpose(y.astype(jnp.float32))           # (out_dim, B)

    def resident_spec(arr):                               # whole array, once
        return pl.BlockSpec(arr.shape, lambda k: (0, 0))

    grid_spec = pltpu.PrefetchScalarGridSpec(
        num_scalar_prefetch=0,
        grid=(n_k,),
        in_specs=[
            pl.BlockSpec((B, TK), lambda k: (0, k)),      # x   (streamed)
            pl.BlockSpec((TK, D0), lambda k: (k, 0)),     # wb  (streamed)
            resident_spec(vec),
            resident_spec(w1), resident_spec(w2), resident_spec(w3),
            resident_spec(w4t), resident_spec(b4),
            resident_spec(y_t),
        ],
        out_specs=(
            pl.BlockSpec((out_dim, B), lambda k: (0, 0)), # logits^T
            pl.BlockSpec(memory_space=pltpu.MemorySpace.SMEM),  # scalar loss
        ),
        scratch_shapes=[pltpu.VMEM((B, D0), jnp.float32)],
    )

    # VMEM budget derived from actual array sizes (+~2x headroom), capped so
    # the same kernel fits v7x's 64 MiB VMEM.
    def nbytes(a):
        return a.size * a.dtype.itemsize
    resident = sum(nbytes(a) for a in (vec, w1, w2, w3, w4t, b4, y_t))
    streamed = 2 * (B * TK + TK * D0) * 2                 # 2 bufs, bf16 tiles
    scratch = B * D0 * 4
    outs = out_dim * B * 4 + 4
    vmem_limit = int(2 * (resident + streamed + scratch + outs)) + (1 << 20)
    vmem_limit = min(max(vmem_limit, 2 << 20), 64 << 20)

    logits_t, loss = pl.pallas_call(
        functools.partial(_predict_aug_kernel, (D0, D1, D2, D3)),
        out_shape=(
            jax.ShapeDtypeStruct((out_dim, B), jnp.float32),
            jax.ShapeDtypeStruct((1, 1), jnp.float32),
        ),
        grid_spec=grid_spec,
        compiler_params=pltpu.CompilerParams(
            dimension_semantics=("arbitrary",),
            vmem_limit_bytes=vmem_limit),
    )(x_flat, wb, vec, w1, w2, w3, w4t, b4, y_t)

    loss = loss[0, 0]
    logits = jnp.transpose(logits_t)                      # (B, out_dim)
    # Host-side metric in the original code; plain JAX here.
    mean_ap = _average_precision_macro(y.astype(jnp.float32), logits)
    return loss, mean_ap


def _average_precision_macro(y_true, y_score):
    # Plain-JAX equivalent of sklearn.metrics.average_precision_score(
    #   y_true, y_score, average='macro').  Metric only (host-side in the
    #   original).  Diverges from sklearn when a column has zero positives
    #   (returns 0 instead of nan) and for exact score ties.
    def ap_single(yt, ys):
        order = jnp.argsort(-ys)
        yt_sorted = yt[order]
        tp_cum = jnp.cumsum(yt_sorted)
        precision = tp_cum / jnp.arange(1, yt.shape[0] + 1, dtype=jnp.float32)
        n_pos = jnp.sum(yt_sorted)
        return jnp.sum(precision * yt_sorted) / jnp.maximum(n_pos, 1.0)

    aps = jax.vmap(ap_single, in_axes=(1, 1))(y_true, y_score)
    return jnp.mean(aps)


# --------------------------- parameter setup ---------------------------------
def make_params(key, in_features, backbone_out_dim=32,
                hidden_dims=(256, 64, 16), out_dim=1):
    dims_in = [in_features, backbone_out_dim, hidden_dims[0], hidden_dims[1],
               hidden_dims[2]]
    dims_out = [backbone_out_dim, hidden_dims[0], hidden_dims[1],
                hidden_dims[2], out_dim]
    names = ["b", "1", "2", "3", "4"]
    params = {}
    for name, di, do in zip(names, dims_in, dims_out):
        key, kw, kb = jax.random.split(key, 3)
        scale = 1.0 / jnp.sqrt(jnp.float32(di))
        params["w" + name] = (jax.random.normal(kw, (di, do), jnp.float32)
                              * scale)
        params["b" + name] = (jax.random.normal(kb, (1, do), jnp.float32)
                              * 0.01)
    # BatchNorm affine params (gamma=1, beta=0 as in PyTorch default init)
    for name, do in zip(["1", "2", "3"], hidden_dims):
        params["g" + name] = jnp.ones((1, do), jnp.float32)
        params["t" + name] = jnp.zeros((1, do), jnp.float32)
    return params


# ------------------------------- main ----------------------------------------
if __name__ == "__main__":
    key = jax.random.PRNGKey(0)
    kx, ky, kp = jax.random.split(key, 3)

    B, C, H, W = 8, 4, 16, 16          # NCHW input (small demo shape)
    OUT_DIM = 1                        # PredictAug default out_dim

    x = jax.random.normal(kx, (B, C, H, W), jnp.float32)
    y = jax.random.bernoulli(ky, 0.5, (B, OUT_DIM)).astype(jnp.float32)

    params = make_params(kp, in_features=C * H * W, backbone_out_dim=32,
                         hidden_dims=(256, 64, 16), out_dim=OUT_DIM)
    prep = prepare_params(params)      # one-time packing, off the hot path

    loss, mean_ap = predict_aug_forward(x, y, prep)
    jax.block_until_ready((loss, mean_ap))
    print("KERNEL_OK")
</pallas_src>

<mosaic_0001>
module attributes {stable_mosaic.version = 11 : i64} {
  func.func @_predict_aug_kernel(%arg0: i32, %arg1: memref<8x512xbf16, #tpu.memory_space<vmem>>, %arg2: memref<512x32xbf16, #tpu.memory_space<vmem>>, %arg3: memref<10x256xf32, #tpu.memory_space<vmem>>, %arg4: memref<32x256xbf16, #tpu.memory_space<vmem>>, %arg5: memref<256x64xbf16, #tpu.memory_space<vmem>>, %arg6: memref<64x16xbf16, #tpu.memory_space<vmem>>, %arg7: memref<1x16xbf16, #tpu.memory_space<vmem>>, %arg8: memref<1x1xf32, #tpu.memory_space<vmem>>, %arg9: memref<1x8xf32, #tpu.memory_space<vmem>>, %arg10: memref<1x8xf32, #tpu.memory_space<vmem>>, %arg11: memref<1x1xf32, #tpu.memory_space<smem>>, %arg12: memref<8x32xf32, #tpu.memory_space<vmem>>) attributes {dimension_semantics = [#tpu.dimension_semantics<arbitrary>], iteration_bounds = array<i64: 2>, scalar_prefetch = 0 : i64, scratch_operands = 1 : i64, tpu.core_type = #tpu.core_type<tc>, window_params = [{transform_indices = @transform_0, window_bounds = array<i64: 8, 512>}, {transform_indices = @transform_1, window_bounds = array<i64: 512, 32>}, {pipeline_mode = #tpu.pipeline_mode<synchronous>, transform_indices = @transform_2, window_bounds = array<i64: 10, 256>}, {pipeline_mode = #tpu.pipeline_mode<synchronous>, transform_indices = @transform_3, window_bounds = array<i64: 32, 256>}, {pipeline_mode = #tpu.pipeline_mode<synchronous>, transform_indices = @transform_4, window_bounds = array<i64: 256, 64>}, {pipeline_mode = #tpu.pipeline_mode<synchronous>, transform_indices = @transform_5, window_bounds = array<i64: 64, 16>}, {pipeline_mode = #tpu.pipeline_mode<synchronous>, transform_indices = @transform_6, window_bounds = array<i64: 1, 16>}, {pipeline_mode = #tpu.pipeline_mode<synchronous>, transform_indices = @transform_7, window_bounds = array<i64: 1, 1>}, {pipeline_mode = #tpu.pipeline_mode<synchronous>, transform_indices = @transform_8, window_bounds = array<i64: 1, 8>}, {pipeline_mode = #tpu.pipeline_mode<synchronous>, transform_indices = @transform_9, window_bounds = array<i64: 1, 8>}, {transform_indices = @transform_10, window_bounds = array<i64: 1, 1>}]} {
    %c0_i32 = arith.constant 0 : i32
    %0 = arith.cmpi eq, %arg0, %c0_i32 : i32
    %1 = arith.extui %0 : i1 to i32
    %c0_i32_0 = arith.constant 0 : i32
    %2 = arith.cmpi ne, %1, %c0_i32_0 : i32
    scf.if %2 {
      %cst_9 = arith.constant 0.000000e+00 : f32
      %12 = vector.broadcast %cst_9 : f32 to vector<8x32xf32>
      %c0_10 = arith.constant 0 : index
      %c0_11 = arith.constant 0 : index
      %13 = vector.load %arg12[%c0_10, %c0_11] : memref<8x32xf32, #tpu.memory_space<vmem>>, vector<8x32xf32>
      tpu.vector_store %arg12[%c0_10, %c0_11], %12 {strides = array<i32>} : memref<8x32xf32, #tpu.memory_space<vmem>>, vector<8x32xf32>,
    } else {
    }
    %c0 = arith.constant 0 : index
    %c0_1 = arith.constant 0 : index
    %3 = vector.load %arg12[%c0, %c0_1] : memref<8x32xf32, #tpu.memory_space<vmem>>, vector<8x32xf32>
    %c0_2 = arith.constant 0 : index
    %c0_3 = arith.constant 0 : index
    %4 = vector.load %arg1[%c0_2, %c0_3] : memref<8x512xbf16, #tpu.memory_space<vmem>>, vector<8x512xbf16>
    %c0_4 = arith.constant 0 : index
    %c0_5 = arith.constant 0 : index
    %5 = vector.load %arg2[%c0_4, %c0_5] : memref<512x32xbf16, #tpu.memory_space<vmem>>, vector<512x32xbf16>
    %cst = arith.constant dense<0.000000e+00> : vector<8x32xf32>
    %6 = tpu.matmul %4, %5, %cst {dimension_numbers = #tpu.dot_dimension_numbers<[1], [0], [0], [1], [0, 0, 1, 1], [], []>} : vector<8x512xbf16>, vector<512x32xbf16>, vector<8x32xf32> -> vector<8x32xf32>
    %7 = arith.addf %3, %6 : vector<8x32xf32>
    %c0_6 = arith.constant 0 : index
    %c0_7 = arith.constant 0 : index
    %8 = vector.load %arg12[%c0_6, %c0_7] : memref<8x32xf32, #tpu.memory_space<vmem>>, vector<8x32xf32>
    tpu.vector_store %arg12[%c0_6, %c0_7], %7 {strides = array<i32>} : memref<8x32xf32, #tpu.memory_space<vmem>>, vector<8x32xf32>,
    %c1_i32 = arith.constant 1 : i32
    %9 = arith.cmpi eq, %arg0, %c1_i32 : i32
    %10 = arith.extui %9 : i1 to i32
    %c0_i32_8 = arith.constant 0 : i32
    %11 = arith.cmpi ne, %10, %c0_i32_8 : i32
    scf.if %11 {
      %c0_9 = arith.constant 0 : index
      %c0_10 = arith.constant 0 : index
      %12 = vector.load %arg12[%c0_9, %c0_10] : memref<8x32xf32, #tpu.memory_space<vmem>>, vector<8x32xf32>
      %c0_11 = arith.constant 0 : index
      %c0_12 = arith.constant 0 : index
      %13 = vector.load %arg3[%c0_11, %c0_12] : memref<10x256xf32, #tpu.memory_space<vmem>>, vector<1x32xf32>
      %14 = vector.broadcast %13 : vector<1x32xf32> to vector<8x32xf32>
      %15 = arith.addf %12, %14 : vector<8x32xf32>
      %16 = arith.truncf %15 : vector<8x32xf32> to vector<8x32xbf16>
      %c0_13 = arith.constant 0 : index
      %c0_14 = arith.constant 0 : index
      %17 = vector.load %arg4[%c0_13, %c0_14] : memref<32x256xbf16, #tpu.memory_space<vmem>>, vector<32x256xbf16>
      %cst_15 = arith.constant dense<0.000000e+00> : vector<8x256xf32>
      %18 = tpu.matmul %16, %17, %cst_15 {dimension_numbers = #tpu.dot_dimension_numbers<[1], [0], [0], [1], [0, 0, 1, 1], [], []>} : vector<8x32xbf16>, vector<32x256xbf16>, vector<8x256xf32> -> vector<8x256xf32>
      %c1 = arith.constant 1 : index
      %c0_16 = arith.constant 0 : index
      %19 = vector.load %arg3[%c1, %c0_16] : memref<10x256xf32, #tpu.memory_space<vmem>>, vector<1x256xf32>
      %20 = vector.broadcast %19 : vector<1x256xf32> to vector<8x256xf32>
      %21 = arith.addf %18, %20 : vector<8x256xf32>
      %cst_17 = arith.constant dense<0.000000e+00> : vector<256xf32>
      %22 = vector.multi_reduction <add>, %21, %cst_17 [0] : vector<8x256xf32> to vector<256xf32>
      %23 = vector.shape_cast %22 : vector<256xf32> to vector<1x256xf32>
      %cst_18 = arith.constant 8.000000e+00 : f32
      %24 = vector.broadcast %cst_18 : f32 to vector<1x256xf32>
      %25 = arith.divf %23, %24 : vector<1x256xf32>
      %26 = vector.broadcast %25 : vector<1x256xf32> to vector<8x256xf32>
      %27 = arith.subf %21, %26 : vector<8x256xf32>
      %28 = arith.mulf %27, %27 : vector<8x256xf32>
      %cst_19 = arith.constant dense<0.000000e+00> : vector<256xf32>
      %29 = vector.multi_reduction <add>, %28, %cst_19 [0] : vector<8x256xf32> to vector<256xf32>
      %30 = vector.shape_cast %29 : vector<256xf32> to vector<1x256xf32>
      %cst_20 = arith.constant 8.000000e+00 : f32
      %31 = vector.broadcast %cst_20 : f32 to vector<1x256xf32>
      %32 = arith.divf %30, %31 : vector<1x256xf32>
      %cst_21 = arith.constant 9.99999974E-6 : f32
      %33 = vector.broadcast %cst_21 : f32 to vector<1x256xf32>
      %34 = arith.addf %32, %33 : vector<1x256xf32>
      %35 = math.rsqrt %34 : vector<1x256xf32>
      %36 = vector.broadcast %35 : vector<1x256xf32> to vector<8x256xf32>
      %37 = arith.mulf %27, %36 : vector<8x256xf32>
      %c2 = arith.constant 2 : index
      %c0_22 = arith.constant 0 : index
      %38 = vector.load %arg3[%c2, %c0_22] : memref<10x256xf32, #tpu.memory_space<vmem>>, vector<1x256xf32>
      %39 = vector.broadcast %38 : vector<1x256xf32> to vector<8x256xf32>
      %40 = arith.mulf %37, %39 : vector<8x256xf32>
      %c3 = arith.constant 3 : index
      %c0_23 = arith.constant 0 : index
      %41 = vector.load %arg3[%c3, %c0_23] : memref<10x256xf32, #tpu.memory_space<vmem>>, vector<1x256xf32>
      %42 = vector.broadcast %41 : vector<1x256xf32> to vector<8x256xf32>
      %43 = arith.addf %40, %42 : vector<8x256xf32>
      %cst_24 = arith.constant 0.000000e+00 : f32
      %44 = vector.broadcast %cst_24 : f32 to vector<8x256xf32>
      %45 = arith.maximumf %43, %44 : vector<8x256xf32>
      %46 = arith.truncf %45 : vector<8x256xf32> to vector<8x256xbf16>
      %c0_25 = arith.constant 0 : index
      %c0_26 = arith.constant 0 : index
      %47 = vector.load %arg5[%c0_25, %c0_26] : memref<256x64xbf16, #tpu.memory_space<vmem>>, vector<256x64xbf16>
      %cst_27 = arith.constant dense<0.000000e+00> : vector<8x64xf32>
      %48 = tpu.matmul %46, %47, %cst_27 {dimension_numbers = #tpu.dot_dimension_numbers<[1], [0], [0], [1], [0, 0, 1, 1], [], []>} : vector<8x256xbf16>, vector<256x64xbf16>, vector<8x64xf32> -> vector<8x64xf32>
      %c4 = arith.constant 4 : index
      %c0_28 = arith.constant 0 : index
      %49 = vector.load %arg3[%c4, %c0_28] : memref<10x256xf32, #tpu.memory_space<vmem>>, vector<1x64xf32>
      %50 = vector.broadcast %49 : vector<1x64xf32> to vector<8x64xf32>
      %51 = arith.addf %48, %50 : vector<8x64xf32>
      %cst_29 = arith.constant dense<0.000000e+00> : vector<64xf32>
      %52 = vector.multi_reduction <add>, %51, %cst_29 [0] : vector<8x64xf32> to vector<64xf32>
      %53 = vector.shape_cast %52 : vector<64xf32> to vector<1x64xf32>
      %cst_30 = arith.constant 8.000000e+00 : f32
      %54 = vector.broadcast %cst_30 : f32 to vector<1x64xf32>
      %55 = arith.divf %53, %54 : vector<1x64xf32>
      %56 = vector.broadcast %55 : vector<1x64xf32> to vector<8x64xf32>
      %57 = arith.subf %51, %56 : vector<8x64xf32>
      %58 = arith.mulf %57, %57 : vector<8x64xf32>
      %cst_31 = arith.constant dense<0.000000e+00> : vector<64xf32>
      %59 = vector.multi_reduction <add>, %58, %cst_31 [0] : vector<8x64xf32> to vector<64xf32>
      %60 = vector.shape_cast %59 : vector<64xf32> to vector<1x64xf32>
      %cst_32 = arith.constant 8.000000e+00 : f32
      %61 = vector.broadcast %cst_32 : f32 to vector<1x64xf32>
      %62 = arith.divf %60, %61 : vector<1x64xf32>
      %cst_33 = arith.constant 9.99999974E-6 : f32
      %63 = vector.broadcast %cst_33 : f32 to vector<1x64xf32>
      %64 = arith.addf %62, %63 : vector<1x64xf32>
      %65 = math.rsqrt %64 : vector<1x64xf32>
      %66 = vector.broadcast %65 : vector<1x64xf32> to vector<8x64xf32>
      %67 = arith.mulf %57, %66 : vector<8x64xf32>
      %c5 = arith.constant 5 : index
      %c0_34 = arith.constant 0 : index
      %68 = vector.load %arg3[%c5, %c0_34] : memref<10x256xf32, #tpu.memory_space<vmem>>, vector<1x64xf32>
      %69 = vector.broadcast %68 : vector<1x64xf32> to vector<8x64xf32>
      %70 = arith.mulf %67, %69 : vector<8x64xf32>
      %c6 = arith.constant 6 : index
      %c0_35 = arith.constant 0 : index
      %71 = vector.load %arg3[%c6, %c0_35] : memref<10x256xf32, #tpu.memory_space<vmem>>, vector<1x64xf32>
      %72 = vector.broadcast %71 : vector<1x64xf32> to vector<8x64xf32>
      %73 = arith.addf %70, %72 : vector<8x64xf32>
      %cst_36 = arith.constant 0.000000e+00 : f32
      %74 = vector.broadcast %cst_36 : f32 to vector<8x64xf32>
      %75 = arith.maximumf %73, %74 : vector<8x64xf32>
      %76 = arith.truncf %75 : vector<8x64xf32> to vector<8x64xbf16>
      %c0_37 = arith.constant 0 : index
      %c0_38 = arith.constant 0 : index
      %77 = vector.load %arg6[%c0_37, %c0_38] : memref<64x16xbf16, #tpu.memory_space<vmem>>, vector<64x16xbf16>
      %cst_39 = arith.constant dense<0.000000e+00> : vector<8x16xf32>
      %78 = tpu.matmul %76, %77, %cst_39 {dimension_numbers = #tpu.dot_dimension_numbers<[1], [0], [0], [1], [0, 0, 1, 1], [], []>} : vector<8x64xbf16>, vector<64x16xbf16>, vector<8x16xf32> -> vector<8x16xf32>
      %c7 = arith.constant 7 : index
      %c0_40 = arith.constant 0 : index
      %79 = vector.load %arg3[%c7, %c0_40] : memref<10x256xf32, #tpu.memory_space<vmem>>, vector<1x16xf32>
      %80 = vector.broadcast %79 : vector<1x16xf32> to vector<8x16xf32>
      %81 = arith.addf %78, %80 : vector<8x16xf32>
      %cst_41 = arith.constant dense<0.000000e+00> : vector<16xf32>
      %82 = vector.multi_reduction <add>, %81, %cst_41 [0] : vector<8x16xf32> to vector<16xf32>
      %83 = vector.shape_cast %82 : vector<16xf32> to vector<1x16xf32>
      %cst_42 = arith.constant 8.000000e+00 : f32
      %84 = vector.broadcast %cst_42 : f32 to vector<1x16xf32>
      %85 = arith.divf %83, %84 : vector<1x16xf32>
      %86 = vector.broadcast %85 : vector<1x16xf32> to vector<8x16xf32>
      %87 = arith.subf %81, %86 : vector<8x16xf32>
      %88 = arith.mulf %87, %87 : vector<8x16xf32>
      %cst_43 = arith.constant dense<0.000000e+00> : vector<16xf32>
      %89 = vector.multi_reduction <add>, %88, %cst_43 [0] : vector<8x16xf32> to vector<16xf32>
      %90 = vector.shape_cast %89 : vector<16xf32> to vector<1x16xf32>
      %cst_44 = arith.constant 8.000000e+00 : f32
      %91 = vector.broadcast %cst_44 : f32 to vector<1x16xf32>
      %92 = arith.divf %90, %91 : vector<1x16xf32>
      %cst_45 = arith.constant 9.99999974E-6 : f32
      %93 = vector.broadcast %cst_45 : f32 to vector<1x16xf32>
      %94 = arith.addf %92, %93 : vector<1x16xf32>
      %95 = math.rsqrt %94 : vector<1x16xf32>
      %96 = vector.broadcast %95 : vector<1x16xf32> to vector<8x16xf32>
      %97 = arith.mulf %87, %96 : vector<8x16xf32>
      %c8 = arith.constant 8 : index
      %c0_46 = arith.constant 0 : index
      %98 = vector.load %arg3[%c8, %c0_46] : memref<10x256xf32, #tpu.memory_space<vmem>>, vector<1x16xf32>
      %99 = vector.broadcast %98 : vector<1x16xf32> to vector<8x16xf32>
      %100 = arith.mulf %97, %99 : vector<8x16xf32>
      %c9 = arith.constant 9 : index
      %c0_47 = arith.constant 0 : index
      %101 = vector.load %arg3[%c9, %c0_47] : memref<10x256xf32, #tpu.memory_space<vmem>>, vector<1x16xf32>
      %102 = vector.broadcast %101 : vector<1x16xf32> to vector<8x16xf32>
      %103 = arith.addf %100, %102 : vector<8x16xf32>
      %cst_48 = arith.constant 0.000000e+00 : f32
      %104 = vector.broadcast %cst_48 : f32 to vector<8x16xf32>
      %105 = arith.maximumf %103, %104 : vector<8x16xf32>
      %c0_49 = arith.constant 0 : index
      %c0_50 = arith.constant 0 : index
      %106 = vector.load %arg7[%c0_49, %c0_50] : memref<1x16xbf16, #tpu.memory_space<vmem>>, vector<1x16xbf16>
      %107 = arith.truncf %105 : vector<8x16xf32> to vector<8x16xbf16>
      "tpu.trace_start"() <{level = 10 : i32, message = "ok,bk->ob"}> : () -> ()
      %cst_51 = arith.constant dense<0.000000e+00> : vector<1x8xf32>
      %108 = tpu.matmul %106, %107, %cst_51 {dimension_numbers = #tpu.dot_dimension_numbers<[1], [1], [0], [0], [0, 0, 1, 0], [], []>} : vector<1x16xbf16>, vector<8x16xbf16>, vector<1x8xf32> -> vector<1x8xf32>
      "tpu.trace_stop"() : () -> ()
      %c0_52 = arith.constant 0 : index
      %c0_53 = arith.constant 0 : index
      %109 = vector.load %arg8[%c0_52, %c0_53] : memref<1x1xf32, #tpu.memory_space<vmem>>, vector<1x1xf32>
      %110 = vector.broadcast %109 : vector<1x1xf32> to vector<1x8xf32>
      %111 = arith.addf %108, %110 : vector<1x8xf32>
      %c0_54 = arith.constant 0 : index
      %c0_55 = arith.constant 0 : index
      %112 = vector.load %arg10[%c0_54, %c0_55] : memref<1x8xf32, #tpu.memory_space<vmem>>, vector<1x8xf32>
      tpu.vector_store %arg10[%c0_54, %c0_55], %111 {strides = array<i32>} : memref<1x8xf32, #tpu.memory_space<vmem>>, vector<1x8xf32>,
      %c0_56 = arith.constant 0 : index
      %c0_57 = arith.constant 0 : index
      %113 = vector.load %arg9[%c0_56, %c0_57] : memref<1x8xf32, #tpu.memory_space<vmem>>, vector<1x8xf32>
      %cst_58 = arith.constant 0.000000e+00 : f32
      %114 = vector.broadcast %cst_58 : f32 to vector<1x8xf32>
      %115 = arith.maximumf %111, %114 : vector<1x8xf32>
      %116 = arith.mulf %111, %113 : vector<1x8xf32>
      %117 = arith.subf %115, %116 : vector<1x8xf32>
      %118 = math.absf %111 : vector<1x8xf32>
      %cst_59 = arith.constant 0.000000e+00 : f32
      %119 = vector.broadcast %cst_59 : f32 to vector<1x8xf32>
      %120 = arith.subf %119, %118 : vector<1x8xf32>
      %121 = math.exp %120 : vector<1x8xf32>
      %122 = math.log1p %121 : vector<1x8xf32>
      %123 = arith.addf %117, %122 : vector<1x8xf32>
      %124 = vector.shape_cast %123 : vector<1x8xf32> to vector<1x1x8xf32>
      %cst_60 = arith.constant dense<0.000000e+00> : vector<1xf32>
      %125 = vector.multi_reduction <add>, %124, %cst_60 [1, 2] : vector<1x1x8xf32> to vector<1xf32>
      %126 = vector.shape_cast %125 : vector<1xf32> to vector<1x1x1xf32>
      %127 = vector.extract %126[0, 0, 0] : f32 from vector<1x1x1xf32>
      %cst_61 = arith.constant 8.000000e+00 : f32
      %128 = arith.divf %127, %cst_61 : f32
      %c0_62 = arith.constant 0 : index
      %c0_63 = arith.constant 0 : index
      %129 = memref.load %arg11[%c0_62, %c0_63] : memref<1x1xf32, #tpu.memory_space<smem>>
      memref.store %128, %arg11[%c0_62, %c0_63] : memref<1x1xf32, #tpu.memory_space<smem>>
    } else {
    }
    return
  }
  func.func @transform_0(%arg0: i32) -> (i32, i32) {
    %c0_i32 = arith.constant 0 : i32
    %c0_i32_0 = arith.constant 0 : i32
    return %c0_i32, %arg0 : i32, i32
  }
  func.func @transform_1(%arg0: i32) -> (i32, i32) {
    %c0_i32 = arith.constant 0 : i32
    %c0_i32_0 = arith.constant 0 : i32
    return %arg0, %c0_i32 : i32, i32
  }
  func.func @transform_2(%arg0: i32) -> (i32, i32) {
    %c0_i32 = arith.constant 0 : i32
    %c0_i32_0 = arith.constant 0 : i32
    %c0_i32_1 = arith.constant 0 : i32
    return %c0_i32, %c0_i32_0 : i32, i32
  }
  func.func @transform_3(%arg0: i32) -> (i32, i32) {
    %c0_i32 = arith.constant 0 : i32
    %c0_i32_0 = arith.constant 0 : i32
    %c0_i32_1 = arith.constant 0 : i32
    return %c0_i32, %c0_i32_0 : i32, i32
  }
  func.func @transform_4(%arg0: i32) -> (i32, i32) {
    %c0_i32 = arith.constant 0 : i32
    %c0_i32_0 = arith.constant 0 : i32
    %c0_i32_1 = arith.constant 0 : i32
    return %c0_i32, %c0_i32_0 : i32, i32
  }
  func.func @transform_5(%arg0: i32) -> (i32, i32) {
    %c0_i32 = arith.constant 0 : i32
    %c0_i32_0 = arith.constant 0 : i32
    %c0_i32_1 = arith.constant 0 : i32
    return %c0_i32, %c0_i32_0 : i32, i32
  }
  func.func @transform_6(%arg0: i32) -> (i32, i32) {
    %c0_i32 = arith.constant 0 : i32
    %c0_i32_0 = arith.constant 0 : i32
    %c0_i32_1 = arith.constant 0 : i32
    return %c0_i32, %c0_i32_0 : i32, i32
  }
  func.func @transform_7(%arg0: i32) -> (i32, i32) {
    %c0_i32 = arith.constant 0 : i32
    %c0_i32_0 = arith.constant 0 : i32
    %c0_i32_1 = arith.constant 0 : i32
    return %c0_i32, %c0_i32_0 : i32, i32
  }
  func.func @transform_8(%arg0: i32) -> (i32, i32) {
    %c0_i32 = arith.constant 0 : i32
    %c0_i32_0 = arith.constant 0 : i32
    %c0_i32_1 = arith.constant 0 : i32
    return %c0_i32, %c0_i32_0 : i32, i32
  }
  func.func @transform_9(%arg0: i32) -> (i32, i32) {
    %c0_i32 = arith.constant 0 : i32
    %c0_i32_0 = arith.constant 0 : i32
    %c0_i32_1 = arith.constant 0 : i32
    return %c0_i32, %c0_i32_0 : i32, i32
  }
  func.func @transform_10(%arg0: i32) -> (i32, i32) {
    %c0_i32 = arith.constant 0 : i32
    %c0_i32_0 = arith.constant 0 : i32
    %c0_i32_1 = arith.constant 0 : i32
    return %c0_i32, %c0_i32_0 : i32, i32
  }
}

</mosaic_0001>

<llo_original>
// kernel: predict_aug_forward.1
$region0: #{predict_aug_forward.1}
  #allocation0 [shape = 'u32[]', space=smem, size = 0x4, offset = 0x4, fixed_abs, tag = 'smem constant byte address 0x4 - core index']
  #allocation1 [shape = 'u32[72,128]{1,0:T(1,128)}', space=vmem, size = 0x9000, scoped, tag = 'internal scratch']
  #allocation2 [shape = 'f32[8,32]{1,0:T(8,128)}', space=vmem, size = 0x1000, scoped, tag = 'scratch operand']
  #allocation3 [shape = 'f32[1,1]{1,0:T(1,128)S(1)}', space=vmem, size = 0x200, scoped, tag = 'scoped memory for predict_aug_forward.1']
  %s0 = inlined_call_operand.vmem [shape: bf16[8,1024], index: 0, kind: input, shape index: {}]
  %s1 = inlined_call_operand.vmem [shape: bf16[1024,32], index: 1, kind: input, shape index: {}]
  %s2 = inlined_call_operand.vmem [shape: f32[10,256], index: 2, kind: input, shape index: {}]
  %s3 = inlined_call_operand.vmem [shape: bf16[32,256], index: 3, kind: input, shape index: {}]
  %s4 = inlined_call_operand.vmem [shape: bf16[256,64], index: 4, kind: input, shape index: {}]
  %s5 = inlined_call_operand.vmem [shape: bf16[64,16], index: 5, kind: input, shape index: {}]
  %s6 = inlined_call_operand.vmem [shape: bf16[1,16], index: 6, kind: input, shape index: {}]
  %s7 = inlined_call_operand.<no memory space> [shape: f32[1,1], index: 7, kind: input, shape index: {}]
  %s8 = inlined_call_operand.vmem [shape: f32[1,8], index: 8, kind: input, shape index: {}]
  %s9 = inlined_call_operand.vmem [shape: f32[1,8], index: 9, kind: output, shape index: {0}]
  %s10 = inlined_call_operand.hbm [shape: f32[1,1], index: 10, kind: output, shape index: {1}]
  %11 = xla_tuple %s9, %s10
  %s12 = sld [smem:[#allocation0]]
  $region85: #{predict_aug_forward.1} parent=0
    _
  %s14 = ssub.s32 1, %s12
  %s15 = scalar_select 0, %s14, %s12
  %v16 = vstv %s7
  %17 = vst [vmem:[#allocation3] sm:$0x1] %v16
  $region1: #{predict_aug_forward.1} parent=0
    #allocation4 [shape = 'u8[512]{0}', space=smem, size = 0x200, scoped, tag = 'output window, operand 1, single buffered']
    #allocation5 [shape = 's32[2]{0}', space=sflag, size = 0x8, scoped, tag = 'scoped memory for predict_aug_forward.1']
    %18 = vsyncpa [#allocation5], 0
    loop: start=0, step=1, limit=4
    $region2: #{predict_aug_forward.1} parent=1 // loop_pre_header
      _
    $region3: #{predict_aug_forward.1} parent=1 // loop_header
      %s20 = sphi 0, %s24
      %p21 = scmp.ge.s32.totalorder %s20, 4
      %s30 = sphi 0, %s32
      %s33 = sphi 0, %s30
      %s34 = sphi 0, %s33
      %s50 = sphi 0, %s34
      %s56 = sphi 0, %s58
      %s59 = sphi 0, %s56
      %s60 = sphi 0, %s59
      %s76 = sphi 0, %s60
      %s80 = sphi 0, %s80
      %s82 = sphi 0, %s80
      %s83 = sphi 0, %s82
      %s97 = sphi 0, %s83
      %s101 = sphi 0, %s101
      %s103 = sphi 0, %s101
      %s104 = sphi 0, %s103
      %s118 = sphi 0, %s104
      %s122 = sphi 0, %s122
      %s124 = sphi 0, %s122
      %s125 = sphi 0, %s124
      %s139 = sphi 0, %s125
      %s143 = sphi 0, %s143
      %s145 = sphi 0, %s143
      %s146 = sphi 0, %s145
      %s160 = sphi 0, %s146
      %s164 = sphi 0, %s164
      %s166 = sphi 0, %s164
      %s167 = sphi 0, %s166
      %s181 = sphi 0, %s167
      %s185 = sphi 0, %s185
      %s187 = sphi 0, %s185
      %s188 = sphi 0, %s187
      %s202 = sphi 0, %s188
      %s206 = sphi 0, %s206
      %s208 = sphi 0, %s206
      %s209 = sphi 0, %s208
      %s223 = sphi 0, %s209
      %s227 = sphi 0, %s227
      %s229 = sphi 0, %s227
      %s230 = sphi 0, %s229
      %s244 = sphi 0, %s230
      %s248 = sphi 0, %s248
      %s250 = sphi 0, %s248
      %s251 = sphi 0, %s250
      %s265 = sphi 0, %s251
    $region4: #{predict_aug_forward.1} parent=1 // loop_header_branch
      %23 = sbr.rel (%p21) target = $region8
    $region5: #{predict_aug_forward.1} parent=1 // loop_body
      %s25 = ssub.s32 %s20, 1
      %s26 = ssub.s32 %s20, 2
      %s27 = sadd.s32 %s20, 1
      %s28 = ssub.s32 %s20, %s27
      %p29 = scmp.eq.s32.totalorder %s28, 0
      %s31 = sadd.s32 %s30, 1
      %s32 = scalar_select %p29, %s30, %s31
      %p35 = pneg %p29
      %p36 = scmp.eq.s32.totalorder %s20, 1
      %p37 = por %p35, %p36
      %p38 = scmp.ne.s32.totalorder %s30, %s33
      %p39 = scmp.eq.s32.totalorder %s20, 0
      %p40 = por %p38, %p39
      %p41 = scmp.ne.s32.totalorder %s30, %s33
      %p42 = scmp.eq.s32.totalorder %s25, 1
      %p43 = por %p41, %p42
      %p44 = scmp.ne.s32.totalorder %s33, %s34
      %p45 = scmp.eq.s32.totalorder %s25, 0
      %p46 = por %p44, %p45
      %p47 = scmp.ne.s32.totalorder %s33, %s34
      %p48 = scmp.eq.s32.totalorder %s26, 1
      %p49 = por %p47, %p48
      %p51 = scmp.ne.s32.totalorder %s34, %s50
      %p52 = scmp.eq.s32.totalorder %s26, 0
      %p53 = por %p51, %p52
      %s54 = ssub.s32 %s20, %s27
      %p55 = scmp.eq.s32.totalorder %s54, 0
      %s57 = sadd.s32 %s56, 1
      %s58 = scalar_select %p55, %s56, %s57
      %p61 = pneg %p55
      %p62 = scmp.eq.s32.totalorder %s20, 1
      %p63 = por %p61, %p62
      %p64 = scmp.ne.s32.totalorder %s56, %s59
      %p65 = scmp.eq.s32.totalorder %s20, 0
      %p66 = por %p64, %p65
      %p67 = scmp.ne.s32.totalorder %s56, %s59
      %p68 = scmp.eq.s32.totalorder %s25, 1
      %p69 = por %p67, %p68
      %p70 = scmp.ne.s32.totalorder %s59, %s60
      %p71 = scmp.eq.s32.totalorder %s25, 0
      %p72 = por %p70, %p71
      %p73 = scmp.ne.s32.totalorder %s59, %s60
      %p74 = scmp.eq.s32.totalorder %s26, 1
      %p75 = por %p73, %p74
      %p77 = scmp.ne.s32.totalorder %s60, %s76
      %p78 = scmp.eq.s32.totalorder %s26, 0
      %p79 = por %p77, %p78
      %s81 = sadd.s32 %s80, 1
      %p84 = scmp.eq.s32.totalorder %s20, 1
      %p85 = scmp.ne.s32.totalorder %s80, %s82
      %p86 = scmp.eq.s32.totalorder %s20, 0
      %p87 = por %p85, %p86
      %p88 = scmp.ne.s32.totalorder %s80, %s82
      %p89 = scmp.eq.s32.totalorder %s25, 1
      %p90 = por %p88, %p89
      %p91 = scmp.ne.s32.totalorder %s82, %s83
      %p92 = scmp.eq.s32.totalorder %s25, 0
      %p93 = por %p91, %p92
      %p94 = scmp.ne.s32.totalorder %s82, %s83
      %p95 = scmp.eq.s32.totalorder %s26, 1
      %p96 = por %p94, %p95
      %p98 = scmp.ne.s32.totalorder %s83, %s97
      %p99 = scmp.eq.s32.totalorder %s26, 0
      %p100 = por %p98, %p99
      %s102 = sadd.s32 %s101, 1
      %p105 = scmp.eq.s32.totalorder %s20, 1
      %p106 = scmp.ne.s32.totalorder %s101, %s103
      %p107 = scmp.eq.s32.totalorder %s20, 0
      %p108 = por %p106, %p107
      %p109 = scmp.ne.s32.totalorder %s101, %s103
      %p110 = scmp.eq.s32.totalorder %s25, 1
      %p111 = por %p109, %p110
      %p112 = scmp.ne.s32.totalorder %s103, %s104
      %p113 = scmp.eq.s32.totalorder %s25, 0
      %p114 = por %p112, %p113
      %p115 = scmp.ne.s32.totalorder %s103, %s104
      %p116 = scmp.eq.s32.totalorder %s26, 1
      %p117 = por %p115, %p116
      %p119 = scmp.ne.s32.totalorder %s104, %s118
      %p120 = scmp.eq.s32.totalorder %s26, 0
      %p121 = por %p119, %p120
      %s123 = sadd.s32 %s122, 1
      %p126 = scmp.eq.s32.totalorder %s20, 1
      %p127 = scmp.ne.s32.totalorder %s122, %s124
      %p128 = scmp.eq.s32.totalorder %s20, 0
      %p129 = por %p127, %p128
      %p130 = scmp.ne.s32.totalorder %s122, %s124
      %p131 = scmp.eq.s32.totalorder %s25, 1
      %p132 = por %p130, %p131
      %p133 = scmp.ne.s32.totalorder %s124, %s125
      %p134 = scmp.eq.s32.totalorder %s25, 0
      %p135 = por %p133, %p134
      %p136 = scmp.ne.s32.totalorder %s124, %s125
      %p137 = scmp.eq.s32.totalorder %s26, 1
      %p138 = por %p136, %p137
      %p140 = scmp.ne.s32.totalorder %s125, %s139
      %p141 = scmp.eq.s32.totalorder %s26, 0
      %p142 = por %p140, %p141
      %s144 = sadd.s32 %s143, 1
      %p147 = scmp.eq.s32.totalorder %s20, 1
      %p148 = scmp.ne.s32.totalorder %s143, %s145
      %p149 = scmp.eq.s32.totalorder %s20, 0
      %p150 = por %p148, %p149
      %p151 = scmp.ne.s32.totalorder %s143, %s145
      %p152 = scmp.eq.s32.totalorder %s25, 1
      %p153 = por %p151, %p152
      %p154 = scmp.ne.s32.totalorder %s145, %s146
      %p155 = scmp.eq.s32.totalorder %s25, 0
      %p156 = por %p154, %p155
      %p157 = scmp.ne.s32.totalorder %s145, %s146
      %p158 = scmp.eq.s32.totalorder %s26, 1
      %p159 = por %p157, %p158
      %p161 = scmp.ne.s32.totalorder %s146, %s160
      %p162 = scmp.eq.s32.totalorder %s26, 0
      %p163 = por %p161, %p162
      %s165 = sadd.s32 %s164, 1
      %p168 = scmp.eq.s32.totalorder %s20, 1
      %p169 = scmp.ne.s32.totalorder %s164, %s166
      %p170 = scmp.eq.s32.totalorder %s20, 0
      %p171 = por %p169, %p170
      %p172 = scmp.ne.s32.totalorder %s164, %s166
      %p173 = scmp.eq.s32.totalorder %s25, 1
      %p174 = por %p172, %p173
      %p175 = scmp.ne.s32.totalorder %s166, %s167
      %p176 = scmp.eq.s32.totalorder %s25, 0
      %p177 = por %p175, %p176
      %p178 = scmp.ne.s32.totalorder %s166, %s167
      %p179 = scmp.eq.s32.totalorder %s26, 1
      %p180 = por %p178, %p179
      %p182 = scmp.ne.s32.totalorder %s167, %s181
      %p183 = scmp.eq.s32.totalorder %s26, 0
      %p184 = por %p182, %p183
      %s186 = sadd.s32 %s185, 1
      %p189 = scmp.eq.s32.totalorder %s20, 1
      %p190 = scmp.ne.s32.totalorder %s185, %s187
      %p191 = scmp.eq.s32.totalorder %s20, 0
      %p192 = por %p190, %p191
      %p193 = scmp.ne.s32.totalorder %s185, %s187
      %p194 = scmp.eq.s32.totalorder %s25, 1
      %p195 = por %p193, %p194
      %p196 = scmp.ne.s32.totalorder %s187, %s188
      %p197 = scmp.eq.s32.totalorder %s25, 0
      %p198 = por %p196, %p197
      %p199 = scmp.ne.s32.totalorder %s187, %s188
      %p200 = scmp.eq.s32.totalorder %s26, 1
      %p201 = por %p199, %p200
      %p203 = scmp.ne.s32.totalorder %s188, %s202
      %p204 = scmp.eq.s32.totalorder %s26, 0
      %p205 = por %p203, %p204
      %s207 = sadd.s32 %s206, 1
      %p210 = scmp.eq.s32.totalorder %s20, 1
      %p211 = scmp.ne.s32.totalorder %s206, %s208
      %p212 = scmp.eq.s32.totalorder %s20, 0
      %p213 = por %p211, %p212
      %p214 = scmp.ne.s32.totalorder %s206, %s208
      %p215 = scmp.eq.s32.totalorder %s25, 1
      %p216 = por %p214, %p215
      %p217 = scmp.ne.s32.totalorder %s208, %s209
      %p218 = scmp.eq.s32.totalorder %s25, 0
      %p219 = por %p217, %p218
      %p220 = scmp.ne.s32.totalorder %s208, %s209
      %p221 = scmp.eq.s32.totalorder %s26, 1
      %p222 = por %p220, %p221
      %p224 = scmp.ne.s32.totalorder %s209, %s223
      %p225 = scmp.eq.s32.totalorder %s26, 0
      %p226 = por %p224, %p225
      %s228 = sadd.s32 %s227, 1
      %p231 = scmp.eq.s32.totalorder %s20, 1
      %p232 = scmp.ne.s32.totalorder %s227, %s229
      %p233 = scmp.eq.s32.totalorder %s20, 0
      %p234 = por %p232, %p233
      %p235 = scmp.ne.s32.totalorder %s227, %s229
      %p236 = scmp.eq.s32.totalorder %s25, 1
      %p237 = por %p235, %p236
      %p238 = scmp.ne.s32.totalorder %s229, %s230
      %p239 = scmp.eq.s32.totalorder %s25, 0
      %p240 = por %p238, %p239
      %p241 = scmp.ne.s32.totalorder %s229, %s230
      %p242 = scmp.eq.s32.totalorder %s26, 1
      %p243 = por %p241, %p242
      %p245 = scmp.ne.s32.totalorder %s230, %s244
      %p246 = scmp.eq.s32.totalorder %s26, 0
      %p247 = por %p245, %p246
      %s249 = sadd.s32 %s248, 1
      %p252 = scmp.eq.s32.totalorder %s20, 1
      %p253 = scmp.ne.s32.totalorder %s248, %s250
      %p254 = scmp.eq.s32.totalorder %s20, 0
      %p255 = por %p253, %p254
      %p256 = scmp.ne.s32.totalorder %s248, %s250
      %p257 = scmp.eq.s32.totalorder %s25, 1
      %p258 = por %p256, %p257
      %p259 = scmp.ne.s32.totalorder %s250, %s251
      %p260 = scmp.eq.s32.totalorder %s25, 0
      %p261 = por %p259, %p260
      %p262 = scmp.ne.s32.totalorder %s250, %s251
      %p263 = scmp.eq.s32.totalorder %s26, 1
      %p264 = por %p262, %p263
      %p266 = scmp.ne.s32.totalorder %s251, %s265
      %p267 = scmp.eq.s32.totalorder %s26, 0
      %p268 = por %p266, %p267
      %p269 = scmp.le.s32.totalorder 1, %s20
      %p270 = scmp.lt.s32.totalorder %s20, 3
      %p271 = pnand %p269, %p270
      %p272 = pneg %p271
      // Predicated region
      $region9: #{predict_aug_forward.1} parent=5 // pred_check
        _
      $region10: #{predict_aug_forward.1} parent=5 // pred_check_branch
        %274 = sbr.rel (%p271) target = $region12
      $region11: #{predict_aug_forward.1} parent=5 // pred_region
        %s275 = ssub.s32 %s20, 1
        // Predicated region
        $region13: #{predict_aug_forward.1} parent=11 // pred_check
          %p276 = pneg %p93
        $region14: #{predict_aug_forward.1} parent=11 // pred_check_branch
          %278 = sbr.rel (%p276) target = $region16
        $region15: #{predict_aug_forward.1} parent=11 // pred_region
          _
        $region16: #{predict_aug_forward.1} parent=11 // pred_fallthru
          _
        // Predicated region
        $region17: #{predict_aug_forward.1} parent=11 // pred_check
          %p279 = pneg %p114
        $region18: #{predict_aug_forward.1} parent=11 // pred_check_branch
          %281 = sbr.rel (%p279) target = $region20
        $region19: #{predict_aug_forward.1} parent=11 // pred_region
          _
        $region20: #{predict_aug_forward.1} parent=11 // pred_fallthru
          _
        // Predicated region
        $region21: #{predict_aug_forward.1} parent=11 // pred_check
          %p282 = pneg %p135
        $region22: #{predict_aug_forward.1} parent=11 // pred_check_branch
          %284 = sbr.rel (%p282) target = $region24
        $region23: #{predict_aug_forward.1} parent=11 // pred_region
          _
        $region24: #{predict_aug_forward.1} parent=11 // pred_fallthru
          _
        // Predicated region
        $region25: #{predict_aug_forward.1} parent=11 // pred_check
          %p285 = pneg %p156
        $region26: #{predict_aug_forward.1} parent=11 // pred_check_branch
          %287 = sbr.rel (%p285) target = $region28
        $region27: #{predict_aug_forward.1} parent=11 // pred_region
          _
        $region28: #{predict_aug_forward.1} parent=11 // pred_fallthru
          _
        // Predicated region
        $region29: #{predict_aug_forward.1} parent=11 // pred_check
          %p288 = pneg %p177
        $region30: #{predict_aug_forward.1} parent=11 // pred_check_branch
          %290 = sbr.rel (%p288) target = $region32
        $region31: #{predict_aug_forward.1} parent=11 // pred_region
          _
        $region32: #{predict_aug_forward.1} parent=11 // pred_fallthru
          _
        // Predicated region
        $region33: #{predict_aug_forward.1} parent=11 // pred_check
          %p291 = pneg %p198
        $region34: #{predict_aug_forward.1} parent=11 // pred_check_branch
          %293 = sbr.rel (%p291) target = $region36
        $region35: #{predict_aug_forward.1} parent=11 // pred_region
          _
        $region36: #{predict_aug_forward.1} parent=11 // pred_fallthru
          _
        // Predicated region
        $region37: #{predict_aug_forward.1} parent=11 // pred_check
          %p294 = pneg %p219
        $region38: #{predict_aug_forward.1} parent=11 // pred_check_branch
          %296 = sbr.rel (%p294) target = $region40
        $region39: #{predict_aug_forward.1} parent=11 // pred_region
          _
        $region40: #{predict_aug_forward.1} parent=11 // pred_fallthru
          _
      $region12: #{predict_aug_forward.1} parent=5 // pred_fallthru
        _
      %p297 = scmp.lt.s32.totalorder %s20, 2
      // Predicated region
      $region41: #{predict_aug_forward.1} parent=5 // pred_check
        %p298 = pneg %p297
      $region42: #{predict_aug_forward.1} parent=5 // pred_check_branch
        %300 = sbr.rel (%p298) target = $region44
      $region43: #{predict_aug_forward.1} parent=5 // pred_region
        // Predicated region
        $region45: #{predict_aug_forward.1} parent=43 // pred_check
          %p301 = pneg %p40
        $region46: #{predict_aug_forward.1} parent=43 // pred_check_branch
          %303 = sbr.rel (%p301) target = $region48
        $region47: #{predict_aug_forward.1} parent=43 // pred_region
          %s304 = smul.u32 4, %s20
          %p305 = scmp.lt.s32.totalorder %s304, 7
          %s306 = scalar_select %p305, %s304, 7
          %s307 = smul.addr %s306, 4
          %s308 = scalar_lea.vmem %s0, %s307
          %s309 = smul.u32 4, %s20
        $region48: #{predict_aug_forward.1} parent=43 // pred_fallthru
          _
        // Predicated region
        $region49: #{predict_aug_forward.1} parent=43 // pred_check
          %p310 = pneg %p66
        $region50: #{predict_aug_forward.1} parent=43 // pred_check_branch
          %312 = sbr.rel (%p310) target = $region52
        $region51: #{predict_aug_forward.1} parent=43 // pred_region
          %s313 = smul.u32 64, %s20
          %p314 = scmp.lt.s32.totalorder %s313, 127
          %s315 = scalar_select %p314, %s313, 127
          %s316 = smul.addr %s315, 4
          %s317 = scalar_lea.vmem %s1, %s316
          %s318 = smul.u32 64, %s20
        $region52: #{predict_aug_forward.1} parent=43 // pred_fallthru
          _
      $region44: #{predict_aug_forward.1} parent=5 // pred_fallthru
        _
      %p319 = scmp.le.s32.totalorder 1, %s20
      %p320 = scmp.lt.s32.totalorder %s20, 3
      %p321 = pnand %p319, %p320
      %p322 = pneg %p321
      // Predicated region
      $region53: #{predict_aug_forward.1} parent=5 // pred_check
        _
      $region54: #{predict_aug_forward.1} parent=5 // pred_check_branch
        %324 = sbr.rel (%p321) target = $region56
      $region55: #{predict_aug_forward.1} parent=5 // pred_region
        %s325 = ssub.s32 %s20, 1
        %s326 = smul.u32 4, %s25
        %p327 = scmp.lt.s32.totalorder %s326, 7
        %s328 = scalar_select %p327, %s326, 7
        %s329 = smul.addr %s328, 4
        %s330 = scalar_lea.vmem %s0, %s329
        %p331 = pneg %p46
        %p332 = pneg %p43
        %s333 = smul.u32 64, %s25
        %p334 = scmp.lt.s32.totalorder %s333, 127
        %s335 = scalar_select %p334, %s333, 127
        %s336 = smul.addr %s335, 4
        %s337 = scalar_lea.vmem %s1, %s336
        %p338 = pneg %p72
        %p339 = pneg %p69
        %p340 = pneg %p93
        %p341 = pneg %p90
        %p342 = pneg %p114
        %p343 = pneg %p111
        %p344 = pneg %p135
        %p345 = pneg %p132
        %p346 = pneg %p156
        %p347 = pneg %p153
        %p348 = pneg %p177
        %p349 = pneg %p174
        %p350 = pneg %p198
        %p351 = pneg %p195
        %p352 = pneg %p219
        %p353 = pneg %p216
        %p354 = pneg %p240
        %p355 = pneg %p237
        %p356 = pneg %p261
        %p357 = pneg %p258
        %s358 = smul.u32 4, %s25
        %p359 = scmp.lt.s32.totalorder %s358, 7
        %s360 = scalar_select %p359, %s358, 7
        %s361 = smul.addr %s360, 4
        %s362 = scalar_lea.vmem %s0, %s361
        %s363 = smul.u32 4, %s25
        %s364 = smul.u32 64, %s25
        %p365 = scmp.lt.s32.totalorder %s364, 127
        %s366 = scalar_select %p365, %s364, 127
        %s367 = smul.addr %s366, 4
        %s368 = scalar_lea.vmem %s1, %s367
        %s369 = smul.u32 64, %s25
        %p371 = scmp.eq.s32.totalorder %s25, 0
        // Predicated region
        $region57: #{predict_aug_forward.1} parent=55 // pred_check
          %p372 = pneg %p371
        $region58: #{predict_aug_forward.1} parent=55 // pred_check_branch
          %374 = sbr.rel (%p372) target = $region60
        $region59: #{predict_aug_forward.1} parent=55 // pred_region
          %vm375 = vcmask 261120
          %376 = vst.msk [vmem:[#allocation2] sm:$0xff] %vm375, 0.0
        $region60: #{predict_aug_forward.1} parent=55 // pred_fallthru
          _
        %v377 = vld [vmem:[#allocation2] sm:$0xff]
        %v378 = vld [vmem:[%s362] sm:$0xff]
        %v379 = vld [vmem:[%s362 + $0x8] sm:$0xff]
        %v380 = vld [vmem:[%s368] sm:$0xf]
        %v381 = vld [vmem:[%s368 + $0x4] sm:$0xf]
        %v382 = vld [vmem:[%s368 + $0x8] sm:$0xf]
        %v383 = vld [vmem:[%s368 + $0xc] sm:$0xf]
        %v384 = vld [vmem:[%s368 + $0x10] sm:$0xf]
        %v385 = vld [vmem:[%s368 + $0x14] sm:$0xf]
        %v386 = vld [vmem:[%s368 + $0x18] sm:$0xf]
        %v387 = vld [vmem:[%s368 + $0x1c] sm:$0xf]
        %v388 = vld [vmem:[%s368 + $0x20] sm:$0xf]
        %v389 = vld [vmem:[%s368 + $0x24] sm:$0xf]
        %v390 = vld [vmem:[%s368 + $0x28] sm:$0xf]
        %v391 = vld [vmem:[%s368 + $0x2c] sm:$0xf]
        %v392 = vld [vmem:[%s368 + $0x30] sm:$0xf]
        %v393 = vld [vmem:[%s368 + $0x34] sm:$0xf]
        %v394 = vld [vmem:[%s368 + $0x38] sm:$0xf]
        %v395 = vld [vmem:[%s368 + $0x3c] sm:$0xf]
        %v396 = vld [vmem:[%s368 + $0x40] sm:$0xf]
        %v397 = vld [vmem:[%s368 + $0x44] sm:$0xf]
        %v398 = vld [vmem:[%s368 + $0x48] sm:$0xf]
        %v399 = vld [vmem:[%s368 + $0x4c] sm:$0xf]
        %v400 = vld [vmem:[%s368 + $0x50] sm:$0xf]
        %v401 = vld [vmem:[%s368 + $0x54] sm:$0xf]
        %v402 = vld [vmem:[%s368 + $0x58] sm:$0xf]
        %v403 = vld [vmem:[%s368 + $0x5c] sm:$0xf]
        %v404 = vld [vmem:[%s368 + $0x60] sm:$0xf]
        %v405 = vld [vmem:[%s368 + $0x64] sm:$0xf]
        %v406 = vld [vmem:[%s368 + $0x68] sm:$0xf]
        %v407 = vld [vmem:[%s368 + $0x6c] sm:$0xf]
        %v408 = vld [vmem:[%s368 + $0x70] sm:$0xf]
        %v409 = vld [vmem:[%s368 + $0x74] sm:$0xf]
        %v410 = vld [vmem:[%s368 + $0x78] sm:$0xf]
        %v411 = vld [vmem:[%s368 + $0x7c] sm:$0xf]
        %v412 = vld [vmem:[%s368 + $0x80] sm:$0xf]
        %v413 = vld [vmem:[%s368 + $0x84] sm:$0xf]
        %v414 = vld [vmem:[%s368 + $0x88] sm:$0xf]
        %v415 = vld [vmem:[%s368 + $0x8c] sm:$0xf]
        %v416 = vld [vmem:[%s368 + $0x90] sm:$0xf]
        %v417 = vld [vmem:[%s368 + $0x94] sm:$0xf]
        %v418 = vld [vmem:[%s368 + $0x98] sm:$0xf]
        %v419 = vld [vmem:[%s368 + $0x9c] sm:$0xf]
        %v420 = vld [vmem:[%s368 + $0xa0] sm:$0xf]
        %v421 = vld [vmem:[%s368 + $0xa4] sm:$0xf]
        %v422 = vld [vmem:[%s368 + $0xa8] sm:$0xf]
        %v423 = vld [vmem:[%s368 + $0xac] sm:$0xf]
        %v424 = vld [vmem:[%s368 + $0xb0] sm:$0xf]
        %v425 = vld [vmem:[%s368 + $0xb4] sm:$0xf]
        %v426 = vld [vmem:[%s368 + $0xb8] sm:$0xf]
        %v427 = vld [vmem:[%s368 + $0xbc] sm:$0xf]
        %v428 = vld [vmem:[%s368 + $0xc0] sm:$0xf]
        %v429 = vld [vmem:[%s368 + $0xc4] sm:$0xf]
        %v430 = vld [vmem:[%s368 + $0xc8] sm:$0xf]
        %v431 = vld [vmem:[%s368 + $0xcc] sm:$0xf]
        %v432 = vld [vmem:[%s368 + $0xd0] sm:$0xf]
        %v433 = vld [vmem:[%s368 + $0xd4] sm:$0xf]
        %v434 = vld [vmem:[%s368 + $0xd8] sm:$0xf]
        %v435 = vld [vmem:[%s368 + $0xdc] sm:$0xf]
        %v436 = vld [vmem:[%s368 + $0xe0] sm:$0xf]
        %v437 = vld [vmem:[%s368 + $0xe4] sm:$0xf]
        %v438 = vld [vmem:[%s368 + $0xe8] sm:$0xf]
        %v439 = vld [vmem:[%s368 + $0xec] sm:$0xf]
        %v440 = vld [vmem:[%s368 + $0xf0] sm:$0xf]
        %v441 = vld [vmem:[%s368 + $0xf4] sm:$0xf]
        %v442 = vld [vmem:[%s368 + $0xf8] sm:$0xf]
        %v443 = vld [vmem:[%s368 + $0xfc] sm:$0xf]
        %v446 = vunpack.c.l.b16 %v378
        %v447 = vunpack.c.h.b16 %v378
        %v448 = vunpack.c.l.b16 %v379
        %v449 = vunpack.c.h.b16 %v379
        %v450 = vpack.c.b16 %v446, %v446
        %v451 = vpack.c.b16 %v447, %v447
        %v452 = vpack.c.b16 %v448, %v448
        %v453 = vpack.c.b16 %v449, %v449
        %v522 = vunpack.c.l.b16 %v380
        %v523 = vunpack.c.l.b16 %v381
        %v524 = vunpack.c.l.b16 %v382
        %v525 = vunpack.c.l.b16 %v383
        %v526 = vunpack.c.l.b16 %v384
        %v527 = vunpack.c.l.b16 %v385
        %v528 = vunpack.c.l.b16 %v386
        %v529 = vunpack.c.l.b16 %v387
        %v530 = vunpack.c.l.b16 %v388
        %v531 = vunpack.c.l.b16 %v389
        %v532 = vunpack.c.l.b16 %v390
        %v533 = vunpack.c.l.b16 %v391
        %v534 = vunpack.c.l.b16 %v392
        %v535 = vunpack.c.l.b16 %v393
        %v536 = vunpack.c.l.b16 %v394
        %v537 = vunpack.c.l.b16 %v395
        %v538 = vunpack.c.l.b16 %v396
        %v539 = vunpack.c.l.b16 %v397
        %v540 = vunpack.c.l.b16 %v398
        %v541 = vunpack.c.l.b16 %v399
        %v542 = vunpack.c.l.b16 %v400
        %v543 = vunpack.c.l.b16 %v401
        %v544 = vunpack.c.l.b16 %v402
        %v545 = vunpack.c.l.b16 %v403
        %v546 = vunpack.c.l.b16 %v404
        %v547 = vunpack.c.l.b16 %v405
        %v548 = vunpack.c.l.b16 %v406
        %v549 = vunpack.c.l.b16 %v407
        %v550 = vunpack.c.l.b16 %v408
        %v551 = vunpack.c.l.b16 %v409
        %v552 = vunpack.c.l.b16 %v410
        %v553 = vunpack.c.l.b16 %v411
        %v554 = vunpack.c.l.b16 %v412
        %v555 = vunpack.c.l.b16 %v413
        %v556 = vunpack.c.l.b16 %v414
        %v557 = vunpack.c.l.b16 %v415
        %v558 = vunpack.c.l.b16 %v416
        %v559 = vunpack.c.l.b16 %v417
        %v560 = vunpack.c.l.b16 %v418
        %v561 = vunpack.c.l.b16 %v419
        %v562 = vunpack.c.l.b16 %v420
        %v563 = vunpack.c.l.b16 %v421
        %v564 = vunpack.c.l.b16 %v422
        %v565 = vunpack.c.l.b16 %v423
        %v566 = vunpack.c.l.b16 %v424
        %v567 = vunpack.c.l.b16 %v425
        %v568 = vunpack.c.l.b16 %v426
        %v569 = vunpack.c.l.b16 %v427
        %v570 = vunpack.c.l.b16 %v428
        %v571 = vunpack.c.l.b16 %v429
        %v572 = vunpack.c.l.b16 %v430
        %v573 = vunpack.c.l.b16 %v431
        %v574 = vunpack.c.l.b16 %v432
        %v575 = vunpack.c.l.b16 %v433
        %v576 = vunpack.c.l.b16 %v434
        %v577 = vunpack.c.l.b16 %v435
        %v578 = vunpack.c.l.b16 %v436
        %v579 = vunpack.c.l.b16 %v437
        %v580 = vunpack.c.l.b16 %v438
        %v581 = vunpack.c.l.b16 %v439
        %v582 = vunpack.c.l.b16 %v440
        %v583 = vunpack.c.l.b16 %v441
        %v584 = vunpack.c.l.b16 %v442
        %v585 = vunpack.c.l.b16 %v443
        %v586 = vpack.c.b16 %v523, %v522
        %v587 = vpack.c.b16 %v525, %v524
        %v588 = vpack.c.b16 %v527, %v526
        %v589 = vpack.c.b16 %v529, %v528
        %v590 = vpack.c.b16 %v531, %v530
        %v591 = vpack.c.b16 %v533, %v532
        %v592 = vpack.c.b16 %v535, %v534
        %v593 = vpack.c.b16 %v537, %v536
        %v594 = vpack.c.b16 %v539, %v538
        %v595 = vpack.c.b16 %v541, %v540
        %v596 = vpack.c.b16 %v543, %v542
        %v597 = vpack.c.b16 %v545, %v544
        %v598 = vpack.c.b16 %v547, %v546
        %v599 = vpack.c.b16 %v549, %v548
        %v600 = vpack.c.b16 %v551, %v550
        %v601 = vpack.c.b16 %v553, %v552
        %v602 = vpack.c.b16 %v555, %v554
        %v603 = vpack.c.b16 %v557, %v556
        %v604 = vpack.c.b16 %v559, %v558
        %v605 = vpack.c.b16 %v561, %v560
        %v606 = vpack.c.b16 %v563, %v562
        %v607 = vpack.c.b16 %v565, %v564
        %v608 = vpack.c.b16 %v567, %v566
        %v609 = vpack.c.b16 %v569, %v568
        %v610 = vpack.c.b16 %v571, %v570
        %v611 = vpack.c.b16 %v573, %v572
        %v612 = vpack.c.b16 %v575, %v574
        %v613 = vpack.c.b16 %v577, %v576
        %v614 = vpack.c.b16 %v579, %v578
        %v615 = vpack.c.b16 %v581, %v580
        %v616 = vpack.c.b16 %v583, %v582
        %v617 = vpack.c.b16 %v585, %v584
        %650 = vmatpush.bf16.msra.mxu0 %v593
        %651 = vmatpush.bf16.msra.mxu0 %v592
        %652 = vmatpush.bf16.msra.mxu0 %v591
        %653 = vmatpush.bf16.msra.mxu0 %v590
        %654 = vmatpush.bf16.msra.mxu0 %v589
        %655 = vmatpush.bf16.msra.mxu0 %v588
        %656 = vmatpush.bf16.msra.mxu0 %v587
        %657 = vmatpush.bf16.msra.mxu0 %v586
        %658 = vmatmul.bf16.gmra.mxu0 %v450
        %v659 = vpop.f32.mrf.mxu0
        %v660 = vadd.f32 0.0, %v659
        %v661 = vpop.f32.mrf.mxu0
        %662 = vdwg.mxu0
        %663 = vmatpush.bf16.msra.mxu0 %v601
        %664 = vmatpush.bf16.msra.mxu0 %v600
        %665 = vmatpush.bf16.msra.mxu0 %v599
        %666 = vmatpush.bf16.msra.mxu0 %v598
        %667 = vmatpush.bf16.msra.mxu0 %v597
        %668 = vmatpush.bf16.msra.mxu0 %v596
        %669 = vmatpush.bf16.msra.mxu0 %v595
        %670 = vmatpush.bf16.msra.mxu0 %v594
        %671 = vmatmul.bf16.gmra.mxu0 %v451
        %v672 = vpop.f32.mrf.mxu0
        %v673 = vadd.f32 %v660, %v672
        %v674 = vpop.f32.mrf.mxu0
        %675 = vdwg.mxu0
        %676 = vmatpush.bf16.msra.mxu0 %v609
        %677 = vmatpush.bf16.msra.mxu0 %v608
        %678 = vmatpush.bf16.msra.mxu0 %v607
        %679 = vmatpush.bf16.msra.mxu0 %v606
        %680 = vmatpush.bf16.msra.mxu0 %v605
        %681 = vmatpush.bf16.msra.mxu0 %v604
        %682 = vmatpush.bf16.msra.mxu0 %v603
        %683 = vmatpush.bf16.msra.mxu0 %v602
        %684 = vmatmul.bf16.gmra.mxu0 %v452
        %v685 = vpop.f32.mrf.mxu0
        %v686 = vadd.f32 %v673, %v685
        %v687 = vpop.f32.mrf.mxu0
        %688 = vdwg.mxu0
        %689 = vmatpush.bf16.msra.mxu0 %v617
        %690 = vmatpush.bf16.msra.mxu0 %v616
        %691 = vmatpush.bf16.msra.mxu0 %v615
        %692 = vmatpush.bf16.msra.mxu0 %v614
        %693 = vmatpush.bf16.msra.mxu0 %v613
        %694 = vmatpush.bf16.msra.mxu0 %v612
        %695 = vmatpush.bf16.msra.mxu0 %v611
        %696 = vmatpush.bf16.msra.mxu0 %v610
        %697 = vmatmul.bf16.gmra.mxu0 %v453
        %v698 = vpop.f32.mrf.mxu0
        %v699 = vadd.f32 %v686, %v698
        %v700 = vpop.f32.mrf.mxu0
        %701 = vdwg.mxu0
        %v702 = vadd.f32 %v377, %v699
        %vm703 = vcmask 261120
        %704 = vst.msk [vmem:[#allocation2] sm:$0xff] %vm703, %v702
        %p705 = scmp.eq.s32.totalorder %s25, 1
        // Predicated region
        $region61: #{predict_aug_forward.1} parent=55 // pred_check
          %p706 = pneg %p705
        $region62: #{predict_aug_forward.1} parent=55 // pred_check_branch
          %708 = sbr.rel (%p706) target = $region64
        $region63: #{predict_aug_forward.1} parent=55 // pred_region
          %v709 = vld [vmem:[#allocation2] sm:$0xff]
          %v710 = vld [vmem:[%s2] ss:$0 sm:$0xff]
          %v711 = vadd.f32 %v709, %v710
          %v712 = vpack.c.bf16 %v711, %v711
          %v713 = vld [vmem:[%s3] sm:$0xff]
          %v714 = vld [vmem:[%s3 + $0x8] sm:$0xff]
          %v715 = vld [vmem:[%s3 + $0x10] sm:$0xff]
          %v716 = vld [vmem:[%s3 + $0x18] sm:$0xff]
          %s717 = scalar_lea.vmem %s2, 1
          %v718 = vld [vmem:[%s717] ss:$8 sm:$0x3]
          %v720 = vperm.slane %v718, 0
          %v721 = vperm.slane %v718, 1
          %v728 = vunpack.c.l.b16 %v713
          %v729 = vunpack.c.h.b16 %v713
          %v730 = vunpack.c.l.b16 %v714
          %v731 = vunpack.c.h.b16 %v714
          %v732 = vunpack.c.l.b16 %v715
          %v733 = vunpack.c.h.b16 %v715
          %v734 = vunpack.c.l.b16 %v716
          %v735 = vunpack.c.h.b16 %v716
          %v736 = vpack.c.b16 %v730, %v728
          %v737 = vpack.c.b16 %v731, %v729
          %v738 = vpack.c.b16 %v734, %v732
          %v739 = vpack.c.b16 %v735, %v733
          %v745 = vsel %vm703, %v712, 0
          %747 = vmatpush.bf16.msra.mxu0 0
          %748 = vmatpush.bf16.msra.mxu0 0
          %749 = vmatpush.bf16.msra.mxu0 0
          %750 = vmatpush.bf16.msra.mxu0 0
          %751 = vmatpush.bf16.msra.mxu0 0
          %752 = vmatpush.bf16.msra.mxu0 0
          %753 = vmatpush.bf16.msra.mxu0 %v738
          %754 = vmatpush.bf16.msra.mxu0 %v736
          %755 = vmatmul.bf16.gmra.mxu0 %v745
          %v756 = vpop.f32.mrf.mxu0
          %v757 = vadd.f32 %v720, %v756
          %v758 = vpop.f32.mrf.mxu0
          %759 = vdwg.mxu0
          %760 = vmatpush.bf16.msra.mxu0 0
          %761 = vmatpush.bf16.msra.mxu0 0
          %762 = vmatpush.bf16.msra.mxu0 0
          %763 = vmatpush.bf16.msra.mxu0 0
          %764 = vmatpush.bf16.msra.mxu0 0
          %765 = vmatpush.bf16.msra.mxu0 0
          %766 = vmatpush.bf16.msra.mxu0 %v739
          %767 = vmatpush.bf16.msra.mxu0 %v737
          %768 = vmatmul.bf16.gmra.mxu0 %v745
          %v769 = vpop.f32.mrf.mxu0
          %v770 = vadd.f32 %v721, %v769
          %v771 = vpop.f32.mrf.mxu0
          %772 = vdwg.mxu0
          %v773 = vrot.slane %v757, 4
          %v774 = vadd.f32 %v757, %v773
          %v775 = vrot.slane %v774, 2
          %v776 = vadd.f32 %v774, %v775
          %v777 = vrot.slane %v776, 1
          %v778 = vadd.f32 %v776, %v777
          %v779 = vrot.slane %v770, 4
          %v780 = vadd.f32 %v770, %v779
          %v781 = vrot.slane %v780, 2
          %v782 = vadd.f32 %v780, %v781
          %v783 = vrot.slane %v782, 1
          %v784 = vadd.f32 %v782, %v783
          %v785 = vrcp.pop 8.0
          %v786 = vmul.f32 8.0, %v785
          %v787 = vsub.f32 1.0, %v786
          %v788 = vmul.f32 %v785, %v787
          %v789 = vadd.f32 %v785, %v788
          %vm790 = vweird.f32 %v785
          %v791 = vsel %vm790, %v785, %v789
          %v792 = vmul.f32 %v778, %v791
          %v793 = vmul.f32 %v784, %v791
          %v794 = vsub.f32 %v757, %v792
          %v795 = vsub.f32 %v770, %v793
          %v796 = vmul.f32 %v794, %v794
          %v797 = vmul.f32 %v795, %v795
          %v798 = vrot.slane %v796, 4
          %v799 = vadd.f32 %v796, %v798
          %v800 = vrot.slane %v799, 2
          %v801 = vadd.f32 %v799, %v800
          %v802 = vrot.slane %v801, 1
          %v803 = vadd.f32 %v801, %v802
          %v804 = vrot.slane %v797, 4
          %v805 = vadd.f32 %v797, %v804
          %v806 = vrot.slane %v805, 2
          %v807 = vadd.f32 %v805, %v806
          %v808 = vrot.slane %v807, 1
          %v809 = vadd.f32 %v807, %v808
          %v810 = vmul.f32 %v803, %v791
          %v811 = vmul.f32 %v809, %v791
          %v812 = vadd.f32 %v810, 1e-05
          %v813 = vadd.f32 %v811, 1e-05
          %v814 = vrsqrt.pop %v812
          %v815 = vmul.f32 %v814, %v812
          %v816 = vmul.f32 %v815, %v814
          %v817 = vmul.f32 0.5, %v816
          %v818 = vsub.f32 1.5, %v817
          %v819 = vmul.f32 %v814, %v818
          %vm820 = vweird.f32 %v812
          %vm821 = vweird.f32 %v814
          %vm822 = vmor %vm820, %vm821
          %v823 = vsel %vm822, %v814, %v819
          %v824 = vrsqrt.pop %v813
          %v825 = vmul.f32 %v824, %v813
          %v826 = vmul.f32 %v825, %v824
          %v827 = vmul.f32 0.5, %v826
          %v828 = vsub.f32 1.5, %v827
          %v829 = vmul.f32 %v824, %v828
          %vm830 = vweird.f32 %v813
          %vm831 = vweird.f32 %v824
          %vm832 = vmor %vm830, %vm831
          %v833 = vsel %vm832, %v824, %v829
          %v834 = vmul.f32 %v794, %v823
          %v835 = vmul.f32 %v795, %v833
          %s836 = scalar_lea.vmem %s2, 2
          %v837 = vld [vmem:[%s836] ss:$8 sm:$0x3]
          %v839 = vperm.slane %v837, 0
          %v840 = vperm.slane %v837, 1
          %v843 = vmul.f32 %v834, %v839
          %v844 = vmul.f32 %v835, %v840
          %s845 = scalar_lea.vmem %s2, 3
          %v846 = vld [vmem:[%s845] ss:$8 sm:$0x3]
          %v848 = vperm.slane %v846, 0
          %v849 = vperm.slane %v846, 1
          %v852 = vadd.f32 %v843, %v848
          %v853 = vadd.f32 %v844, %v849
          %v854 = vmax.f32 %v852, 0.0
          %v855 = vmax.f32 %v853, 0.0
          %v856 = vpack.c.bf16 %v854, %v854
          %v857 = vpack.c.bf16 %v855, %v855
          %v858 = vld [vmem:[%s4] sm:$0xf]
          %v859 = vld [vmem:[%s4 + $0x4] sm:$0xf]
          %v860 = vld [vmem:[%s4 + $0x8] sm:$0xf]
          %v861 = vld [vmem:[%s4 + $0xc] sm:$0xf]
          %v862 = vld [vmem:[%s4 + $0x10] sm:$0xf]
          %v863 = vld [vmem:[%s4 + $0x14] sm:$0xf]
          %v864 = vld [vmem:[%s4 + $0x18] sm:$0xf]
          %v865 = vld [vmem:[%s4 + $0x1c] sm:$0xf]
          %v866 = vld [vmem:[%s4 + $0x20] sm:$0xf]
          %v867 = vld [vmem:[%s4 + $0x24] sm:$0xf]
          %v868 = vld [vmem:[%s4 + $0x28] sm:$0xf]
          %v869 = vld [vmem:[%s4 + $0x2c] sm:$0xf]
          %v870 = vld [vmem:[%s4 + $0x30] sm:$0xf]
          %v871 = vld [vmem:[%s4 + $0x34] sm:$0xf]
          %v872 = vld [vmem:[%s4 + $0x38] sm:$0xf]
          %v873 = vld [vmem:[%s4 + $0x3c] sm:$0xf]
          %v874 = vld [vmem:[%s4 + $0x40] sm:$0xf]
          %v875 = vld [vmem:[%s4 + $0x44] sm:$0xf]
          %v876 = vld [vmem:[%s4 + $0x48] sm:$0xf]
          %v877 = vld [vmem:[%s4 + $0x4c] sm:$0xf]
          %v878 = vld [vmem:[%s4 + $0x50] sm:$0xf]
          %v879 = vld [vmem:[%s4 + $0x54] sm:$0xf]
          %v880 = vld [vmem:[%s4 + $0x58] sm:$0xf]
          %v881 = vld [vmem:[%s4 + $0x5c] sm:$0xf]
          %v882 = vld [vmem:[%s4 + $0x60] sm:$0xf]
          %v883 = vld [vmem:[%s4 + $0x64] sm:$0xf]
          %v884 = vld [vmem:[%s4 + $0x68] sm:$0xf]
          %v885 = vld [vmem:[%s4 + $0x6c] sm:$0xf]
          %v886 = vld [vmem:[%s4 + $0x70] sm:$0xf]
          %v887 = vld [vmem:[%s4 + $0x74] sm:$0xf]
          %v888 = vld [vmem:[%s4 + $0x78] sm:$0xf]
          %v889 = vld [vmem:[%s4 + $0x7c] sm:$0xf]
          %v890 = vld [vmem:[%s2 + $0x4] ss:$0 sm:$0xff]
          %v923 = vunpack.c.l.b16 %v858
          %v924 = vunpack.c.l.b16 %v859
          %v925 = vunpack.c.l.b16 %v860
          %v926 = vunpack.c.l.b16 %v861
          %v927 = vunpack.c.l.b16 %v862
          %v928 = vunpack.c.l.b16 %v863
          %v929 = vunpack.c.l.b16 %v864
          %v930 = vunpack.c.l.b16 %v865
          %v931 = vunpack.c.l.b16 %v866
          %v932 = vunpack.c.l.b16 %v867
          %v933 = vunpack.c.l.b16 %v868
          %v934 = vunpack.c.l.b16 %v869
          %v935 = vunpack.c.l.b16 %v870
          %v936 = vunpack.c.l.b16 %v871
          %v937 = vunpack.c.l.b16 %v872
          %v938 = vunpack.c.l.b16 %v873
          %v939 = vunpack.c.l.b16 %v874
          %v940 = vunpack.c.l.b16 %v875
          %v941 = vunpack.c.l.b16 %v876
          %v942 = vunpack.c.l.b16 %v877
          %v943 = vunpack.c.l.b16 %v878
          %v944 = vunpack.c.l.b16 %v879
          %v945 = vunpack.c.l.b16 %v880
          %v946 = vunpack.c.l.b16 %v881
          %v947 = vunpack.c.l.b16 %v882
          %v948 = vunpack.c.l.b16 %v883
          %v949 = vunpack.c.l.b16 %v884
          %v950 = vunpack.c.l.b16 %v885
          %v951 = vunpack.c.l.b16 %v886
          %v952 = vunpack.c.l.b16 %v887
          %v953 = vunpack.c.l.b16 %v888
          %v954 = vunpack.c.l.b16 %v889
          %v955 = vpack.c.b16 %v924, %v923
          %v956 = vpack.c.b16 %v926, %v925
          %v957 = vpack.c.b16 %v928, %v927
          %v958 = vpack.c.b16 %v930, %v929
          %v959 = vpack.c.b16 %v932, %v931
          %v960 = vpack.c.b16 %v934, %v933
          %v961 = vpack.c.b16 %v936, %v935
          %v962 = vpack.c.b16 %v938, %v937
          %v963 = vpack.c.b16 %v940, %v939
          %v964 = vpack.c.b16 %v942, %v941
          %v965 = vpack.c.b16 %v944, %v943
          %v966 = vpack.c.b16 %v946, %v945
          %v967 = vpack.c.b16 %v948, %v947
          %v968 = vpack.c.b16 %v950, %v949
          %v969 = vpack.c.b16 %v952, %v951
          %v970 = vpack.c.b16 %v954, %v953
          %987 = vmatpush.bf16.msra.mxu0 %v962
          %988 = vmatpush.bf16.msra.mxu0 %v961
          %989 = vmatpush.bf16.msra.mxu0 %v960
          %990 = vmatpush.bf16.msra.mxu0 %v959
          %991 = vmatpush.bf16.msra.mxu0 %v958
          %992 = vmatpush.bf16.msra.mxu0 %v957
          %993 = vmatpush.bf16.msra.mxu0 %v956
          %994 = vmatpush.bf16.msra.mxu0 %v955
          %995 = vmatmul.bf16.gmra.mxu0 %v856
          %v996 = vpop.f32.mrf.mxu0
          %v997 = vadd.f32 %v890, %v996
          %v998 = vpop.f32.mrf.mxu0
          %999 = vdwg.mxu0
          %1000 = vmatpush.bf16.msra.mxu0 %v970
          %1001 = vmatpush.bf16.msra.mxu0 %v969
          %1002 = vmatpush.bf16.msra.mxu0 %v968
          %1003 = vmatpush.bf16.msra.mxu0 %v967
          %1004 = vmatpush.bf16.msra.mxu0 %v966
          %1005 = vmatpush.bf16.msra.mxu0 %v965
          %1006 = vmatpush.bf16.msra.mxu0 %v964
          %1007 = vmatpush.bf16.msra.mxu0 %v963
          %1008 = vmatmul.bf16.gmra.mxu0 %v857
          %v1009 = vpop.f32.mrf.mxu0
          %v1010 = vadd.f32 %v997, %v1009
          %v1011 = vpop.f32.mrf.mxu0
          %1012 = vdwg.mxu0
          %vm1013 = vcmask 523264
          %v1014 = vsel %vm1013, %v1010, 0.0
          %v1015 = vrot.slane %v1014, 4
          %v1016 = vadd.f32 %v1014, %v1015
          %v1017 = vrot.slane %v1016, 2
          %v1018 = vadd.f32 %v1016, %v1017
          %v1019 = vrot.slane %v1018, 1
          %v1020 = vadd.f32 %v1018, %v1019
          %v1021 = vmul.f32 %v1020, %v791
          %v1022 = vsub.f32 %v1010, %v1021
          %v1023 = vmul.f32 %v1022, %v1022
          %v1024 = vsel %vm1013, %v1023, 0.0
          %v1025 = vrot.slane %v1024, 4
          %v1026 = vadd.f32 %v1024, %v1025
          %v1027 = vrot.slane %v1026, 2
          %v1028 = vadd.f32 %v1026, %v1027
          %v1029 = vrot.slane %v1028, 1
          %v1030 = vadd.f32 %v1028, %v1029
          %v1031 = vmul.f32 %v1030, %v791
          %v1032 = vadd.f32 %v1031, 1e-05
          %v1033 = vrsqrt.pop %v1032
          %v1034 = vmul.f32 %v1033, %v1032
          %v1035 = vmul.f32 %v1034, %v1033
          %v1036 = vmul.f32 0.5, %v1035
          %v1037 = vsub.f32 1.5, %v1036
          %v1038 = vmul.f32 %v1033, %v1037
          %vm1039 = vweird.f32 %v1032
          %vm1040 = vweird.f32 %v1033
          %vm1041 = vmor %vm1039, %vm1040
          %v1042 = vsel %vm1041, %v1033, %v1038
          %v1043 = vmul.f32 %v1022, %v1042
          %v1044 = vld [vmem:[%s2 + $0x5] ss:$0 sm:$0xff]
          %v1045 = vmul.f32 %v1043, %v1044
          %v1046 = vld [vmem:[%s2 + $0x6] ss:$0 sm:$0xff]
          %v1047 = vadd.f32 %v1045, %v1046
          %v1048 = vmax.f32 %v1047, 0.0
          %v1049 = vpack.c.bf16 %v1048, %v1048
          %v1050 = vld [vmem:[%s5] sm:$0xf]
          %v1051 = vld [vmem:[%s5 + $0x4] sm:$0xf]
          %v1052 = vld [vmem:[%s5 + $0x8] sm:$0xf]
          %v1053 = vld [vmem:[%s5 + $0xc] sm:$0xf]
          %v1054 = vld [vmem:[%s5 + $0x10] sm:$0xf]
          %v1055 = vld [vmem:[%s5 + $0x14] sm:$0xf]
          %v1056 = vld [vmem:[%s5 + $0x18] sm:$0xf]
          %v1057 = vld [vmem:[%s5 + $0x1c] sm:$0xf]
          %v1058 = vld [vmem:[%s2 + $0x7] ss:$0 sm:$0xff]
          %v1067 = vunpack.c.l.b16 %v1050
          %v1068 = vunpack.c.l.b16 %v1051
          %v1069 = vunpack.c.l.b16 %v1052
          %v1070 = vunpack.c.l.b16 %v1053
          %v1071 = vunpack.c.l.b16 %v1054
          %v1072 = vunpack.c.l.b16 %v1055
          %v1073 = vunpack.c.l.b16 %v1056
          %v1074 = vunpack.c.l.b16 %v1057
          %v1075 = vpack.c.b16 %v1068, %v1067
          %v1076 = vpack.c.b16 %v1070, %v1069
          %v1077 = vpack.c.b16 %v1072, %v1071
          %v1078 = vpack.c.b16 %v1074, %v1073
          %v1084 = vsel %vm1013, %v1049, 0
          %1086 = vmatpush.bf16.msra.mxu0 0
          %1087 = vmatpush.bf16.msra.mxu0 0
          %1088 = vmatpush.bf16.msra.mxu0 0
          %1089 = vmatpush.bf16.msra.mxu0 0
          %1090 = vmatpush.bf16.msra.mxu0 %v1078
          %1091 = vmatpush.bf16.msra.mxu0 %v1077
          %1092 = vmatpush.bf16.msra.mxu0 %v1076
          %1093 = vmatpush.bf16.msra.mxu0 %v1075
          %1094 = vmatmul.bf16.gmra.mxu0 %v1084
          %v1095 = vpop.f32.mrf.mxu0
          %v1096 = vadd.f32 %v1058, %v1095
          %v1097 = vpop.f32.mrf.mxu0
          %1098 = vdwg.mxu0
          %vm1099 = vcmask 130048
          %v1100 = vsel %vm1099, %v1096, 0.0
          %v1101 = vrot.slane %v1100, 4
          %v1102 = vadd.f32 %v1100, %v1101
          %v1103 = vrot.slane %v1102, 2
          %v1104 = vadd.f32 %v1102, %v1103
          %v1105 = vrot.slane %v1104, 1
          %v1106 = vadd.f32 %v1104, %v1105
          %v1107 = vmul.f32 %v1106, %v791
          %v1108 = vsub.f32 %v1096, %v1107
          %v1109 = vmul.f32 %v1108, %v1108
          %v1110 = vsel %vm1099, %v1109, 0.0
          %v1111 = vrot.slane %v1110, 4
          %v1112 = vadd.f32 %v1110, %v1111
          %v1113 = vrot.slane %v1112, 2
          %v1114 = vadd.f32 %v1112, %v1113
          %v1115 = vrot.slane %v1114, 1
          %v1116 = vadd.f32 %v1114, %v1115
          %v1117 = vmul.f32 %v1116, %v791
          %v1118 = vadd.f32 %v1117, 1e-05
          %v1119 = vrsqrt.pop %v1118
          %v1120 = vmul.f32 %v1119, %v1118
          %v1121 = vmul.f32 %v1120, %v1119
          %v1122 = vmul.f32 0.5, %v1121
          %v1123 = vsub.f32 1.5, %v1122
          %v1124 = vmul.f32 %v1119, %v1123
          %vm1125 = vweird.f32 %v1118
          %vm1126 = vweird.f32 %v1119
          %vm1127 = vmor %vm1125, %vm1126
          %v1128 = vsel %vm1127, %v1119, %v1124
          %v1129 = vmul.f32 %v1108, %v1128
          %v1130 = vld [vmem:[%s2 + $0x10] ss:$0 sm:$0xff]
          %v1131 = vmul.f32 %v1129, %v1130
          %v1132 = vld [vmem:[%s2 + $0x11] ss:$0 sm:$0xff]
          %v1133 = vadd.f32 %v1131, %v1132
          %v1134 = vmax.f32 %v1133, 0.0
          %v1135 = vld [vmem:[%s6] sm:$0x1]
          %v1136 = vpack.c.bf16 %v1134, %v1134
          %v1137 = vld [vmem:[#allocation3] sm:$0x1]
          %1139 = vset.pattern.permute.xlu0 0
          %1140 = vperm.xlu0 %1139, %v1137
          %v1141 = vpop.permute.xlu0 %1140
          %v1143 = vperm.slane %v1141, 0
          %v1145 = vsel %vm1099, %v1135, 0
          %v1148 = vsel %vm1099, %v1136, 0
          %1150 = vmatpush.bf16.xpose.msra.mxu0 0
          %1151 = vmatpush.bf16.xpose.msra.mxu0 0
          %1152 = vmatpush.bf16.xpose.msra.mxu0 0
          %1153 = vmatpush.bf16.xpose.msra.mxu0 0
          %1154 = vmatpush.bf16.xpose.msra.mxu0 0
          %1155 = vmatpush.bf16.xpose.msra.mxu0 0
          %1156 = vmatpush.bf16.xpose.msra.mxu0 0
          %1157 = vmatpush.bf16.xpose.msra.mxu0 %v1148
          %1158 = vmatmul.bf16.gmra.mxu0 %v1145
          %v1159 = vpop.f32.mrf.mxu0
          %v1160 = vadd.f32 %v1143, %v1159
          %v1161 = vpop.f32.mrf.mxu0
          %1162 = vdwg.mxu0
          %vm1163 = vcmask 57344
          %1164 = vst.msk [vmem:[%s9] sm:$0x1] %vm1163, %v1160
          %v1165 = vld [vmem:[%s8] sm:$0x1]
          %v1166 = vmax.f32 %v1160, 0.0
          %v1167 = vmul.f32 %v1160, %v1165
          %v1168 = vsub.f32 %v1166, %v1167
          %v1169 = vand.u32 2147483647, %v1160
          %v1170 = vsub.f32 0.0, %v1169
          %v1171 = vmul.f32 %v1170, 1.442695
          %v1172 = vpow.pop %v1171
          %v1173 = vadd.f32 %v1172, 1.0
          %v1174 = vlog2.pop %v1173
          %v1175 = vmul.f32 %v1174, 0.6931472
          %v1176 = vmul.f32 -0.5, %v1172
          %v1177 = vadd.f32 %v1176, 1.0
          %v1178 = vmul.f32 %v1177, %v1172
          %v1179 = vand.u32 2147483647, %v1172
          %vm1180 = vcmp.lt.f32.partialorder %v1179, 0.0004427343
          %v1181 = vsel %vm1180, %v1178, %v1175
          %v1182 = vadd.f32 %v1168, %v1181
          %v1183 = vsel %vm1163, %v1182, 0.0
          %1184 = vadd.xlane.f32.xlu0 %v1183
          %v1185 = vpop.xlane.xlu0 %1184
          %v1186 = vrot.slane %v1185, 4
          %v1187 = vadd.f32 %v1185, %v1186
          %v1188 = vrot.slane %v1187, 2
          %v1189 = vadd.f32 %v1187, %v1188
          %v1190 = vrot.slane %v1189, 1
          %v1191 = vadd.f32 %v1189, %v1190
          %s1192 = vtos %v1191
          %v1193 = vrcp.pop 8.0
          %v1194 = vmul.f32 8.0, %v1193
          %v1195 = vsub.f32 1.0, %v1194
          %v1196 = vmul.f32 %v1193, %v1195
          %v1197 = vadd.f32 %v1193, %v1196
          %vm1198 = vweird.f32 %v1193
          %v1199 = vsel %vm1198, %v1193, %v1197
          %s1200 = vtos %v1199
          %s1201 = smul.f32 %s1192, %s1200
          %s1202 = scalar_lea.smem [#allocation4], 0
          %1203 = sst [smem:[%s1202]] %s1201
        $region64: #{predict_aug_forward.1} parent=55 // pred_fallthru
          _
        // Predicated region
        $region65: #{predict_aug_forward.1} parent=55 // pred_check
          %p1204 = pneg %p237
        $region66: #{predict_aug_forward.1} parent=55 // pred_check_branch
          %1206 = sbr.rel (%p1204) target = $region68
        $region67: #{predict_aug_forward.1} parent=55 // pred_region
          _
        $region68: #{predict_aug_forward.1} parent=55 // pred_fallthru
          _
        // Predicated region
        $region69: #{predict_aug_forward.1} parent=55 // pred_check
          %p1207 = pneg %p258
        $region70: #{predict_aug_forward.1} parent=55 // pred_check_branch
          %1209 = sbr.rel (%p1207) target = $region72
        $region71: #{predict_aug_forward.1} parent=55 // pred_region
          %1211 = vsyncadd [#allocation5], 0
          %s1213 = sshll.u32 %s10, 4
          %s1214 = int_to_ptr.hbm [resolvable:$true] %s1213
          %1216 = dma.smem_to_hbm [#allocation4], 16, %s1214, [#allocation5]
        $region72: #{predict_aug_forward.1} parent=55 // pred_fallthru
          _
        // Predicated region
        $region73: #{predict_aug_forward.1} parent=55 // pred_check
          %p1217 = pneg %p237
        $region74: #{predict_aug_forward.1} parent=55 // pred_check_branch
          %1219 = sbr.rel (%p1217) target = $region76
        $region75: #{predict_aug_forward.1} parent=55 // pred_region
          _
        $region76: #{predict_aug_forward.1} parent=55 // pred_fallthru
          _
        // Predicated region
        $region77: #{predict_aug_forward.1} parent=55 // pred_check
          %p1220 = pneg %p258
        $region78: #{predict_aug_forward.1} parent=55 // pred_check_branch
          %1222 = sbr.rel (%p1220) target = $region80
        $region79: #{predict_aug_forward.1} parent=55 // pred_region
          %1224 = dma.done [#allocation5], 16
        $region80: #{predict_aug_forward.1} parent=55 // pred_fallthru
          _
        %1225 = sfence
      $region56: #{predict_aug_forward.1} parent=5 // pred_fallthru
        _
      %p1226 = scmp.le.s32.totalorder 2, %s20
      // Predicated region
      $region81: #{predict_aug_forward.1} parent=5 // pred_check
        %p1227 = pneg %p1226
      $region82: #{predict_aug_forward.1} parent=5 // pred_check_branch
        %1229 = sbr.rel (%p1227) target = $region84
      $region83: #{predict_aug_forward.1} parent=5 // pred_region
        %s1230 = ssub.s32 %s20, 2
      $region84: #{predict_aug_forward.1} parent=5 // pred_fallthru
        _
    $region6: #{predict_aug_forward.1} parent=1 // loop_footer
      %s24 = sadd.s32 1, %s20
    $region7: #{predict_aug_forward.1} parent=1 // loop_footer_branch
      %19 = sbr.rel target = $region3
    $region8: #{predict_aug_forward.1} parent=1 // loop_exit
      _
    %1231 = vsyncpa [#allocation5], 1
    %s1232 = scalar_lea.sflag [#allocation5], 1
    %1233 = vsyncpa %s1232, 1

</llo_original>
